<compile_context>
chip_gen: v5e
topology: v5e:2x2
jax: 0.10.0
libtpu: 0.0.40
codegen_flags: <defaults>
</compile_context>

<pallas_src>
import jax
import jax.numpy as jnp
from jax.experimental import pallas as pl
from jax.experimental.pallas import tpu as pltpu

GP = 128          # packed gate width == lane width (4 * hidden_size must fit)
QS = GP // 4      # 32-lane quarter per gate
# Quarter -> PyTorch gate index (PyTorch weight row order is [i, f, g, o]).
# Packed quarter order is [f, i, o, g]  (see roll-direction note above).
QUARTER_GATE = (1, 0, 3, 2)


# ---------------------------------------------------------------------------
# Fused kernel: all layers, all time steps, and the fc head in one invocation.
# ---------------------------------------------------------------------------
def fused_lstm_kernel(x_ref, wih_ref, whh_ref, b_ref,
                      w1_ref, b1_ref, w2_ref, b2_ref, out_ref):
    L = wih_ref.shape[0]
    B = out_ref.shape[0]
    T = x_ref.shape[0] // B

    lane = jax.lax.broadcasted_iota(jnp.int32, (B, GP), 1)
    g_mask = lane >= 3 * QS           # lanes of the cell ("g") gate -> tanh

    seq = x_ref[...]                  # (T*B, GP) bf16, time-major rows
    h_last = None
    for l in range(L):                # static layer loop
        w_ih = wih_ref[l]             # (GP, GP) bf16
        w_hh = whh_ref[l]             # (GP, GP) bf16, loaded ONCE per layer
        bias = b_ref[l]               # (1, GP)  f32

        # Batched input-gate precompute for the whole sequence (one big M).
        gx = jnp.dot(seq, w_ih, preferred_element_type=jnp.float32) + bias

        h = jnp.zeros((B, GP), jnp.float32)
        c = jnp.zeros((B, GP), jnp.float32)
        hs = []
        for t in range(T):            # serial recurrence; h/c stay in vregs
            if t == 0:
                gates = gx[0:B, :]    # h0 == 0 -> recurrent term is zero
            else:
                gh = jnp.dot(h.astype(w_hh.dtype), w_hh,
                             preferred_element_type=jnp.float32)
                gates = gx[t * B:(t + 1) * B, :] + gh

            # One tanh for everything: sigmoid(x) = 0.5*tanh(0.5*x) + 0.5.
            tt = jnp.tanh(jnp.where(g_mask, gates, 0.5 * gates))
            act = jnp.where(g_mask, tt, 0.5 * tt + 0.5)

            # Quarters packed [f, i, o, g].  Rolls by QS and 3*QS fetch {i, g}
            # in either order (product commutes); roll by 2*QS always fetches o.
            r1 = pltpu.roll(act, QS, axis=1)
            r2 = pltpu.roll(act, 2 * QS, axis=1)
            r3 = pltpu.roll(act, 3 * QS, axis=1)

            c = act * c + r1 * r3     # lanes [0:H] hold the true cell state
            h = r2 * jnp.tanh(c)      # lanes [0:H] hold the true hidden state
            if l < L - 1:
                hs.append(h)

        if l < L - 1:                 # next layer's input sequence (bf16)
            seq = jnp.concatenate(hs, axis=0).astype(jnp.bfloat16)
        h_last = h

    # fc head: relu(relu(h @ W1 + b1) @ W2 + b2), all 128-lane padded.
    y = jnp.dot(h_last.astype(w1_ref.dtype), w1_ref[...],
                preferred_element_type=jnp.float32) + b1_ref[...]
    y = jnp.maximum(y, 0.0)
    z = jnp.dot(y.astype(w2_ref.dtype), w2_ref[...],
                preferred_element_type=jnp.float32) + b2_ref[...]
    out_ref[...] = jnp.maximum(z, 0.0).astype(out_ref.dtype)


# ---------------------------------------------------------------------------
# Parameter packing: gates packed into 128 lanes ([f, i, o, g] quarters),
# W_ih / W_hh / head weights in bf16, biases combined, zero padding inert.
# ---------------------------------------------------------------------------
def pack_params(params, input_size, hidden_size, output_size):
    H = hidden_size
    assert H <= QS, "kernel packs 4 gates into 128 lanes; needs hidden_size<=32"
    wih_list, whh_list, b_list = [], [], []
    for layer, (w_ih, w_hh, b_ih, b_hh) in enumerate(params["lstm"]):
        d_in = input_size if layer == 0 else H
        wih = jnp.zeros((GP, GP), jnp.float32)
        whh = jnp.zeros((GP, GP), jnp.float32)
        b = jnp.zeros((GP,), jnp.float32)
        for q, g in enumerate(QUARTER_GATE):
            wih = wih.at[0:d_in, q * QS:q * QS + H].set(w_ih[g * H:(g + 1) * H, :].T)
            whh = whh.at[0:H, q * QS:q * QS + H].set(w_hh[g * H:(g + 1) * H, :].T)
            b = b.at[q * QS:q * QS + H].set(
                b_ih[g * H:(g + 1) * H] + b_hh[g * H:(g + 1) * H])
        wih_list.append(wih)
        whh_list.append(whh)
        b_list.append(b)

    w1, b1, w2, b2 = params["head"]                   # PyTorch (out, in) layout
    w1_p = jnp.zeros((GP, GP), jnp.float32).at[0:H, 0:H].set(w1.T)
    w2_p = jnp.zeros((GP, GP), jnp.float32).at[0:H, 0:output_size].set(w2.T)
    b1_p = jnp.zeros((1, GP), jnp.float32).at[0, 0:H].set(b1)
    b2_p = jnp.zeros((1, GP), jnp.float32).at[0, 0:output_size].set(b2)
    return dict(
        wih=jnp.stack(wih_list).astype(jnp.bfloat16),     # (L, GP, GP)
        whh=jnp.stack(whh_list).astype(jnp.bfloat16),     # (L, GP, GP)
        b=jnp.stack(b_list)[:, None, :],                  # (L, 1, GP) f32
        w1=w1_p.astype(jnp.bfloat16), b1=b1_p,
        w2=w2_p.astype(jnp.bfloat16), b2=b2_p,
    )


# ---------------------------------------------------------------------------
# Full model forward (single pallas_call, whole arrays resident in VMEM)
# ---------------------------------------------------------------------------
def lstm_model_forward(x, packed, output_size):
    """x: (B, T, input_size) batch_first. Returns (B, output_size)."""
    B, T, D = x.shape
    x_tm = jnp.transpose(x, (1, 0, 2)).reshape(T * B, D)       # time-major rows
    x_pad = (jnp.zeros((T * B, GP), jnp.float32).at[:, :D].set(x_tm)
             .astype(jnp.bfloat16))

    out = pl.pallas_call(
        fused_lstm_kernel,
        out_shape=jax.ShapeDtypeStruct((B, GP), jnp.float32),
    )(x_pad, packed["wih"], packed["whh"], packed["b"],
      packed["w1"], packed["b1"], packed["w2"], packed["b2"])
    return out[:, :output_size]


# ---------------------------------------------------------------------------
# Deterministic parameter init (PyTorch shapes / gate ordering)
# ---------------------------------------------------------------------------
def init_params(key, input_size, hidden_size, num_layers, output_size):
    H = hidden_size
    k_lstm = 1.0 / jnp.sqrt(H)
    layers = []
    for layer in range(num_layers):
        d_in = input_size if layer == 0 else H
        key, k1, k2, k3, k4 = jax.random.split(key, 5)
        w_ih = jax.random.uniform(k1, (4 * H, d_in), jnp.float32, -k_lstm, k_lstm)
        w_hh = jax.random.uniform(k2, (4 * H, H), jnp.float32, -k_lstm, k_lstm)
        b_ih = jax.random.uniform(k3, (4 * H,), jnp.float32, -k_lstm, k_lstm)
        b_hh = jax.random.uniform(k4, (4 * H,), jnp.float32, -k_lstm, k_lstm)
        layers.append((w_ih, w_hh, b_ih, b_hh))

    key, k1, k2, k3, k4 = jax.random.split(key, 5)
    k_fc = 1.0 / jnp.sqrt(H)
    w1 = jax.random.uniform(k1, (H, H), jnp.float32, -k_fc, k_fc)
    b1 = jax.random.uniform(k2, (H,), jnp.float32, -k_fc, k_fc)
    w2 = jax.random.uniform(k3, (output_size, H), jnp.float32, -k_fc, k_fc)
    b2 = jax.random.uniform(k4, (output_size,), jnp.float32, -k_fc, k_fc)
    return {"lstm": layers, "head": (w1, b1, w2, b2)}


# ---------------------------------------------------------------------------
# Pure-JAX reference (unpadded, f32, PyTorch layout & gate order [i, f, g, o])
# ---------------------------------------------------------------------------
def reference_forward(x, params):
    B, T, _ = x.shape
    seq = jnp.transpose(x, (1, 0, 2))                # (T, B, D)
    for (w_ih, w_hh, b_ih, b_hh) in params["lstm"]:
        H = w_hh.shape[1]

        def step(carry, x_t):
            h, c = carry
            g = x_t @ w_ih.T + h @ w_hh.T + b_ih + b_hh
            i = jax.nn.sigmoid(g[:, 0:H])
            f = jax.nn.sigmoid(g[:, H:2 * H])
            gg = jnp.tanh(g[:, 2 * H:3 * H])
            o = jax.nn.sigmoid(g[:, 3 * H:4 * H])
            c = f * c + i * gg
            h = o * jnp.tanh(c)
            return (h, c), h

        init = (jnp.zeros((B, H), jnp.float32), jnp.zeros((B, H), jnp.float32))
        (_, _), seq = jax.lax.scan(step, init, seq)
    h_last = seq[-1]
    w1, b1, w2, b2 = params["head"]
    y = jnp.maximum(h_last @ w1.T + b1, 0.0)
    return jnp.maximum(y @ w2.T + b2, 0.0)


if __name__ == "__main__":
    B, T = 8, 8
    input_size, hidden_size, num_layers, output_size = 16, 32, 2, 8

    key = jax.random.PRNGKey(0)
    key, kx = jax.random.split(key)
    x = jax.random.normal(kx, (B, T, input_size), jnp.float32)

    params = init_params(key, input_size, hidden_size, num_layers, output_size)
    packed = pack_params(params, input_size, hidden_size, output_size)

    out = lstm_model_forward(x, packed, output_size)
    out = jax.block_until_ready(out)

    ref = reference_forward(x, params)
    assert out.shape == (B, output_size)
    # bf16 weights/activations (f32 accumulation + f32 cell state) vs f32 ref.
    assert jnp.allclose(out, ref, rtol=2e-2, atol=2e-2), "mismatch vs reference"

    print("KERNEL_OK")
</pallas_src>

<mosaic_0001>
module attributes {stable_mosaic.version = 11 : i64} {
  func.func @fused_lstm_kernel(%arg0: memref<64x128xbf16, #tpu.memory_space<vmem>>, %arg1: memref<2x128x128xbf16, #tpu.memory_space<vmem>>, %arg2: memref<2x128x128xbf16, #tpu.memory_space<vmem>>, %arg3: memref<2x1x128xf32, #tpu.memory_space<vmem>>, %arg4: memref<128x128xbf16, #tpu.memory_space<vmem>>, %arg5: memref<1x128xf32, #tpu.memory_space<vmem>>, %arg6: memref<128x128xbf16, #tpu.memory_space<vmem>>, %arg7: memref<1x128xf32, #tpu.memory_space<vmem>>, %arg8: memref<8x128xf32, #tpu.memory_space<vmem>>) attributes {dimension_semantics = [], scalar_prefetch = 0 : i64, scratch_operands = 0 : i64, tpu.core_type = #tpu.core_type<tc>} {
    %0 = tpu.iota {dimensions = array<i32: 1>} : vector<8x128xi32>
    %c96_i32 = arith.constant 96 : i32
    %1 = vector.broadcast %c96_i32 : i32 to vector<8x128xi32>
    %2 = arith.cmpi sge, %0, %1 : vector<8x128xi32>
    %c0 = arith.constant 0 : index
    %c0_0 = arith.constant 0 : index
    %3 = vector.load %arg0[%c0, %c0_0] : memref<64x128xbf16, #tpu.memory_space<vmem>>, vector<64x128xbf16>
    %c0_1 = arith.constant 0 : index
    %c0_2 = arith.constant 0 : index
    %c0_3 = arith.constant 0 : index
    %4 = vector.load %arg1[%c0_1, %c0_2, %c0_3] : memref<2x128x128xbf16, #tpu.memory_space<vmem>>, vector<1x128x128xbf16>
    %5 = vector.shape_cast %4 : vector<1x128x128xbf16> to vector<128x128xbf16>
    %c0_4 = arith.constant 0 : index
    %c0_5 = arith.constant 0 : index
    %c0_6 = arith.constant 0 : index
    %6 = vector.load %arg2[%c0_4, %c0_5, %c0_6] : memref<2x128x128xbf16, #tpu.memory_space<vmem>>, vector<1x128x128xbf16>
    %7 = vector.shape_cast %6 : vector<1x128x128xbf16> to vector<128x128xbf16>
    %c0_7 = arith.constant 0 : index
    %c0_8 = arith.constant 0 : index
    %c0_9 = arith.constant 0 : index
    %8 = vector.load %arg3[%c0_7, %c0_8, %c0_9] : memref<2x1x128xf32, #tpu.memory_space<vmem>>, vector<1x1x128xf32>
    %9 = vector.shape_cast %8 : vector<1x1x128xf32> to vector<1x128xf32>
    %cst = arith.constant dense<0.000000e+00> : vector<64x128xf32>
    %10 = tpu.matmul %3, %5, %cst {dimension_numbers = #tpu.dot_dimension_numbers<[1], [0], [0], [1], [0, 0, 1, 1], [], []>} : vector<64x128xbf16>, vector<128x128xbf16>, vector<64x128xf32> -> vector<64x128xf32>
    %11 = vector.broadcast %9 : vector<1x128xf32> to vector<64x128xf32>
    %12 = arith.addf %10, %11 : vector<64x128xf32>
    %cst_10 = arith.constant 0.000000e+00 : f32
    %13 = vector.broadcast %cst_10 : f32 to vector<8x128xf32>
    %14 = vector.extract_strided_slice %12 {offsets = [0, 0], sizes = [8, 128], strides = [1, 1]} : vector<64x128xf32> to vector<8x128xf32>
    %cst_11 = arith.constant 5.000000e-01 : f32
    %15 = vector.broadcast %cst_11 : f32 to vector<8x128xf32>
    %16 = arith.mulf %15, %14 : vector<8x128xf32>
    %17 = arith.select %2, %14, %16 : vector<8x128xi1>, vector<8x128xf32>
    %18 = math.tanh %17 : vector<8x128xf32>
    %cst_12 = arith.constant 5.000000e-01 : f32
    %19 = vector.broadcast %cst_12 : f32 to vector<8x128xf32>
    %20 = arith.mulf %19, %18 : vector<8x128xf32>
    %cst_13 = arith.constant 5.000000e-01 : f32
    %21 = vector.broadcast %cst_13 : f32 to vector<8x128xf32>
    %22 = arith.addf %20, %21 : vector<8x128xf32>
    %23 = arith.select %2, %18, %22 : vector<8x128xi1>, vector<8x128xf32>
    %c32_i32 = arith.constant 32 : i32
    %24 = tpu.dynamic_rotate %23 by %c32_i32 dim 1 : vector<8x128xf32>, i32 -> vector<8x128xf32>
    %c64_i32 = arith.constant 64 : i32
    %25 = tpu.dynamic_rotate %23 by %c64_i32 dim 1 : vector<8x128xf32>, i32 -> vector<8x128xf32>
    %c96_i32_14 = arith.constant 96 : i32
    %26 = tpu.dynamic_rotate %23 by %c96_i32_14 dim 1 : vector<8x128xf32>, i32 -> vector<8x128xf32>
    %27 = arith.mulf %23, %13 : vector<8x128xf32>
    %28 = arith.mulf %24, %26 : vector<8x128xf32>
    %29 = arith.addf %27, %28 : vector<8x128xf32>
    %30 = math.tanh %29 : vector<8x128xf32>
    %31 = arith.mulf %25, %30 : vector<8x128xf32>
    %32 = arith.truncf %31 : vector<8x128xf32> to vector<8x128xbf16>
    %cst_15 = arith.constant dense<0.000000e+00> : vector<8x128xf32>
    %33 = tpu.matmul %32, %7, %cst_15 {dimension_numbers = #tpu.dot_dimension_numbers<[1], [0], [0], [1], [0, 0, 1, 1], [], []>} : vector<8x128xbf16>, vector<128x128xbf16>, vector<8x128xf32> -> vector<8x128xf32>
    %34 = vector.extract_strided_slice %12 {offsets = [8, 0], sizes = [8, 128], strides = [1, 1]} : vector<64x128xf32> to vector<8x128xf32>
    %35 = arith.addf %34, %33 : vector<8x128xf32>
    %cst_16 = arith.constant 5.000000e-01 : f32
    %36 = vector.broadcast %cst_16 : f32 to vector<8x128xf32>
    %37 = arith.mulf %36, %35 : vector<8x128xf32>
    %38 = arith.select %2, %35, %37 : vector<8x128xi1>, vector<8x128xf32>
    %39 = math.tanh %38 : vector<8x128xf32>
    %cst_17 = arith.constant 5.000000e-01 : f32
    %40 = vector.broadcast %cst_17 : f32 to vector<8x128xf32>
    %41 = arith.mulf %40, %39 : vector<8x128xf32>
    %cst_18 = arith.constant 5.000000e-01 : f32
    %42 = vector.broadcast %cst_18 : f32 to vector<8x128xf32>
    %43 = arith.addf %41, %42 : vector<8x128xf32>
    %44 = arith.select %2, %39, %43 : vector<8x128xi1>, vector<8x128xf32>
    %c32_i32_19 = arith.constant 32 : i32
    %45 = tpu.dynamic_rotate %44 by %c32_i32_19 dim 1 : vector<8x128xf32>, i32 -> vector<8x128xf32>
    %c64_i32_20 = arith.constant 64 : i32
    %46 = tpu.dynamic_rotate %44 by %c64_i32_20 dim 1 : vector<8x128xf32>, i32 -> vector<8x128xf32>
    %c96_i32_21 = arith.constant 96 : i32
    %47 = tpu.dynamic_rotate %44 by %c96_i32_21 dim 1 : vector<8x128xf32>, i32 -> vector<8x128xf32>
    %48 = arith.mulf %44, %29 : vector<8x128xf32>
    %49 = arith.mulf %45, %47 : vector<8x128xf32>
    %50 = arith.addf %48, %49 : vector<8x128xf32>
    %51 = math.tanh %50 : vector<8x128xf32>
    %52 = arith.mulf %46, %51 : vector<8x128xf32>
    %53 = arith.truncf %52 : vector<8x128xf32> to vector<8x128xbf16>
    %cst_22 = arith.constant dense<0.000000e+00> : vector<8x128xf32>
    %54 = tpu.matmul %53, %7, %cst_22 {dimension_numbers = #tpu.dot_dimension_numbers<[1], [0], [0], [1], [0, 0, 1, 1], [], []>} : vector<8x128xbf16>, vector<128x128xbf16>, vector<8x128xf32> -> vector<8x128xf32>
    %55 = vector.extract_strided_slice %12 {offsets = [16, 0], sizes = [8, 128], strides = [1, 1]} : vector<64x128xf32> to vector<8x128xf32>
    %56 = arith.addf %55, %54 : vector<8x128xf32>
    %cst_23 = arith.constant 5.000000e-01 : f32
    %57 = vector.broadcast %cst_23 : f32 to vector<8x128xf32>
    %58 = arith.mulf %57, %56 : vector<8x128xf32>
    %59 = arith.select %2, %56, %58 : vector<8x128xi1>, vector<8x128xf32>
    %60 = math.tanh %59 : vector<8x128xf32>
    %cst_24 = arith.constant 5.000000e-01 : f32
    %61 = vector.broadcast %cst_24 : f32 to vector<8x128xf32>
    %62 = arith.mulf %61, %60 : vector<8x128xf32>
    %cst_25 = arith.constant 5.000000e-01 : f32
    %63 = vector.broadcast %cst_25 : f32 to vector<8x128xf32>
    %64 = arith.addf %62, %63 : vector<8x128xf32>
    %65 = arith.select %2, %60, %64 : vector<8x128xi1>, vector<8x128xf32>
    %c32_i32_26 = arith.constant 32 : i32
    %66 = tpu.dynamic_rotate %65 by %c32_i32_26 dim 1 : vector<8x128xf32>, i32 -> vector<8x128xf32>
    %c64_i32_27 = arith.constant 64 : i32
    %67 = tpu.dynamic_rotate %65 by %c64_i32_27 dim 1 : vector<8x128xf32>, i32 -> vector<8x128xf32>
    %c96_i32_28 = arith.constant 96 : i32
    %68 = tpu.dynamic_rotate %65 by %c96_i32_28 dim 1 : vector<8x128xf32>, i32 -> vector<8x128xf32>
    %69 = arith.mulf %65, %50 : vector<8x128xf32>
    %70 = arith.mulf %66, %68 : vector<8x128xf32>
    %71 = arith.addf %69, %70 : vector<8x128xf32>
    %72 = math.tanh %71 : vector<8x128xf32>
    %73 = arith.mulf %67, %72 : vector<8x128xf32>
    %74 = arith.truncf %73 : vector<8x128xf32> to vector<8x128xbf16>
    %cst_29 = arith.constant dense<0.000000e+00> : vector<8x128xf32>
    %75 = tpu.matmul %74, %7, %cst_29 {dimension_numbers = #tpu.dot_dimension_numbers<[1], [0], [0], [1], [0, 0, 1, 1], [], []>} : vector<8x128xbf16>, vector<128x128xbf16>, vector<8x128xf32> -> vector<8x128xf32>
    %76 = vector.extract_strided_slice %12 {offsets = [24, 0], sizes = [8, 128], strides = [1, 1]} : vector<64x128xf32> to vector<8x128xf32>
    %77 = arith.addf %76, %75 : vector<8x128xf32>
    %cst_30 = arith.constant 5.000000e-01 : f32
    %78 = vector.broadcast %cst_30 : f32 to vector<8x128xf32>
    %79 = arith.mulf %78, %77 : vector<8x128xf32>
    %80 = arith.select %2, %77, %79 : vector<8x128xi1>, vector<8x128xf32>
    %81 = math.tanh %80 : vector<8x128xf32>
    %cst_31 = arith.constant 5.000000e-01 : f32
    %82 = vector.broadcast %cst_31 : f32 to vector<8x128xf32>
    %83 = arith.mulf %82, %81 : vector<8x128xf32>
    %cst_32 = arith.constant 5.000000e-01 : f32
    %84 = vector.broadcast %cst_32 : f32 to vector<8x128xf32>
    %85 = arith.addf %83, %84 : vector<8x128xf32>
    %86 = arith.select %2, %81, %85 : vector<8x128xi1>, vector<8x128xf32>
    %c32_i32_33 = arith.constant 32 : i32
    %87 = tpu.dynamic_rotate %86 by %c32_i32_33 dim 1 : vector<8x128xf32>, i32 -> vector<8x128xf32>
    %c64_i32_34 = arith.constant 64 : i32
    %88 = tpu.dynamic_rotate %86 by %c64_i32_34 dim 1 : vector<8x128xf32>, i32 -> vector<8x128xf32>
    %c96_i32_35 = arith.constant 96 : i32
    %89 = tpu.dynamic_rotate %86 by %c96_i32_35 dim 1 : vector<8x128xf32>, i32 -> vector<8x128xf32>
    %90 = arith.mulf %86, %71 : vector<8x128xf32>
    %91 = arith.mulf %87, %89 : vector<8x128xf32>
    %92 = arith.addf %90, %91 : vector<8x128xf32>
    %93 = math.tanh %92 : vector<8x128xf32>
    %94 = arith.mulf %88, %93 : vector<8x128xf32>
    %95 = arith.truncf %94 : vector<8x128xf32> to vector<8x128xbf16>
    %cst_36 = arith.constant dense<0.000000e+00> : vector<8x128xf32>
    %96 = tpu.matmul %95, %7, %cst_36 {dimension_numbers = #tpu.dot_dimension_numbers<[1], [0], [0], [1], [0, 0, 1, 1], [], []>} : vector<8x128xbf16>, vector<128x128xbf16>, vector<8x128xf32> -> vector<8x128xf32>
    %97 = vector.extract_strided_slice %12 {offsets = [32, 0], sizes = [8, 128], strides = [1, 1]} : vector<64x128xf32> to vector<8x128xf32>
    %98 = arith.addf %97, %96 : vector<8x128xf32>
    %cst_37 = arith.constant 5.000000e-01 : f32
    %99 = vector.broadcast %cst_37 : f32 to vector<8x128xf32>
    %100 = arith.mulf %99, %98 : vector<8x128xf32>
    %101 = arith.select %2, %98, %100 : vector<8x128xi1>, vector<8x128xf32>
    %102 = math.tanh %101 : vector<8x128xf32>
    %cst_38 = arith.constant 5.000000e-01 : f32
    %103 = vector.broadcast %cst_38 : f32 to vector<8x128xf32>
    %104 = arith.mulf %103, %102 : vector<8x128xf32>
    %cst_39 = arith.constant 5.000000e-01 : f32
    %105 = vector.broadcast %cst_39 : f32 to vector<8x128xf32>
    %106 = arith.addf %104, %105 : vector<8x128xf32>
    %107 = arith.select %2, %102, %106 : vector<8x128xi1>, vector<8x128xf32>
    %c32_i32_40 = arith.constant 32 : i32
    %108 = tpu.dynamic_rotate %107 by %c32_i32_40 dim 1 : vector<8x128xf32>, i32 -> vector<8x128xf32>
    %c64_i32_41 = arith.constant 64 : i32
    %109 = tpu.dynamic_rotate %107 by %c64_i32_41 dim 1 : vector<8x128xf32>, i32 -> vector<8x128xf32>
    %c96_i32_42 = arith.constant 96 : i32
    %110 = tpu.dynamic_rotate %107 by %c96_i32_42 dim 1 : vector<8x128xf32>, i32 -> vector<8x128xf32>
    %111 = arith.mulf %107, %92 : vector<8x128xf32>
    %112 = arith.mulf %108, %110 : vector<8x128xf32>
    %113 = arith.addf %111, %112 : vector<8x128xf32>
    %114 = math.tanh %113 : vector<8x128xf32>
    %115 = arith.mulf %109, %114 : vector<8x128xf32>
    %116 = arith.truncf %115 : vector<8x128xf32> to vector<8x128xbf16>
    %cst_43 = arith.constant dense<0.000000e+00> : vector<8x128xf32>
    %117 = tpu.matmul %116, %7, %cst_43 {dimension_numbers = #tpu.dot_dimension_numbers<[1], [0], [0], [1], [0, 0, 1, 1], [], []>} : vector<8x128xbf16>, vector<128x128xbf16>, vector<8x128xf32> -> vector<8x128xf32>
    %118 = vector.extract_strided_slice %12 {offsets = [40, 0], sizes = [8, 128], strides = [1, 1]} : vector<64x128xf32> to vector<8x128xf32>
    %119 = arith.addf %118, %117 : vector<8x128xf32>
    %cst_44 = arith.constant 5.000000e-01 : f32
    %120 = vector.broadcast %cst_44 : f32 to vector<8x128xf32>
    %121 = arith.mulf %120, %119 : vector<8x128xf32>
    %122 = arith.select %2, %119, %121 : vector<8x128xi1>, vector<8x128xf32>
    %123 = math.tanh %122 : vector<8x128xf32>
    %cst_45 = arith.constant 5.000000e-01 : f32
    %124 = vector.broadcast %cst_45 : f32 to vector<8x128xf32>
    %125 = arith.mulf %124, %123 : vector<8x128xf32>
    %cst_46 = arith.constant 5.000000e-01 : f32
    %126 = vector.broadcast %cst_46 : f32 to vector<8x128xf32>
    %127 = arith.addf %125, %126 : vector<8x128xf32>
    %128 = arith.select %2, %123, %127 : vector<8x128xi1>, vector<8x128xf32>
    %c32_i32_47 = arith.constant 32 : i32
    %129 = tpu.dynamic_rotate %128 by %c32_i32_47 dim 1 : vector<8x128xf32>, i32 -> vector<8x128xf32>
    %c64_i32_48 = arith.constant 64 : i32
    %130 = tpu.dynamic_rotate %128 by %c64_i32_48 dim 1 : vector<8x128xf32>, i32 -> vector<8x128xf32>
    %c96_i32_49 = arith.constant 96 : i32
    %131 = tpu.dynamic_rotate %128 by %c96_i32_49 dim 1 : vector<8x128xf32>, i32 -> vector<8x128xf32>
    %132 = arith.mulf %128, %113 : vector<8x128xf32>
    %133 = arith.mulf %129, %131 : vector<8x128xf32>
    %134 = arith.addf %132, %133 : vector<8x128xf32>
    %135 = math.tanh %134 : vector<8x128xf32>
    %136 = arith.mulf %130, %135 : vector<8x128xf32>
    %137 = arith.truncf %136 : vector<8x128xf32> to vector<8x128xbf16>
    %cst_50 = arith.constant dense<0.000000e+00> : vector<8x128xf32>
    %138 = tpu.matmul %137, %7, %cst_50 {dimension_numbers = #tpu.dot_dimension_numbers<[1], [0], [0], [1], [0, 0, 1, 1], [], []>} : vector<8x128xbf16>, vector<128x128xbf16>, vector<8x128xf32> -> vector<8x128xf32>
    %139 = vector.extract_strided_slice %12 {offsets = [48, 0], sizes = [8, 128], strides = [1, 1]} : vector<64x128xf32> to vector<8x128xf32>
    %140 = arith.addf %139, %138 : vector<8x128xf32>
    %cst_51 = arith.constant 5.000000e-01 : f32
    %141 = vector.broadcast %cst_51 : f32 to vector<8x128xf32>
    %142 = arith.mulf %141, %140 : vector<8x128xf32>
    %143 = arith.select %2, %140, %142 : vector<8x128xi1>, vector<8x128xf32>
    %144 = math.tanh %143 : vector<8x128xf32>
    %cst_52 = arith.constant 5.000000e-01 : f32
    %145 = vector.broadcast %cst_52 : f32 to vector<8x128xf32>
    %146 = arith.mulf %145, %144 : vector<8x128xf32>
    %cst_53 = arith.constant 5.000000e-01 : f32
    %147 = vector.broadcast %cst_53 : f32 to vector<8x128xf32>
    %148 = arith.addf %146, %147 : vector<8x128xf32>
    %149 = arith.select %2, %144, %148 : vector<8x128xi1>, vector<8x128xf32>
    %c32_i32_54 = arith.constant 32 : i32
    %150 = tpu.dynamic_rotate %149 by %c32_i32_54 dim 1 : vector<8x128xf32>, i32 -> vector<8x128xf32>
    %c64_i32_55 = arith.constant 64 : i32
    %151 = tpu.dynamic_rotate %149 by %c64_i32_55 dim 1 : vector<8x128xf32>, i32 -> vector<8x128xf32>
    %c96_i32_56 = arith.constant 96 : i32
    %152 = tpu.dynamic_rotate %149 by %c96_i32_56 dim 1 : vector<8x128xf32>, i32 -> vector<8x128xf32>
    %153 = arith.mulf %149, %134 : vector<8x128xf32>
    %154 = arith.mulf %150, %152 : vector<8x128xf32>
    %155 = arith.addf %153, %154 : vector<8x128xf32>
    %156 = math.tanh %155 : vector<8x128xf32>
    %157 = arith.mulf %151, %156 : vector<8x128xf32>
    %158 = arith.truncf %157 : vector<8x128xf32> to vector<8x128xbf16>
    %cst_57 = arith.constant dense<0.000000e+00> : vector<8x128xf32>
    %159 = tpu.matmul %158, %7, %cst_57 {dimension_numbers = #tpu.dot_dimension_numbers<[1], [0], [0], [1], [0, 0, 1, 1], [], []>} : vector<8x128xbf16>, vector<128x128xbf16>, vector<8x128xf32> -> vector<8x128xf32>
    %160 = vector.extract_strided_slice %12 {offsets = [56, 0], sizes = [8, 128], strides = [1, 1]} : vector<64x128xf32> to vector<8x128xf32>
    %161 = arith.addf %160, %159 : vector<8x128xf32>
    %cst_58 = arith.constant 5.000000e-01 : f32
    %162 = vector.broadcast %cst_58 : f32 to vector<8x128xf32>
    %163 = arith.mulf %162, %161 : vector<8x128xf32>
    %164 = arith.select %2, %161, %163 : vector<8x128xi1>, vector<8x128xf32>
    %165 = math.tanh %164 : vector<8x128xf32>
    %cst_59 = arith.constant 5.000000e-01 : f32
    %166 = vector.broadcast %cst_59 : f32 to vector<8x128xf32>
    %167 = arith.mulf %166, %165 : vector<8x128xf32>
    %cst_60 = arith.constant 5.000000e-01 : f32
    %168 = vector.broadcast %cst_60 : f32 to vector<8x128xf32>
    %169 = arith.addf %167, %168 : vector<8x128xf32>
    %170 = arith.select %2, %165, %169 : vector<8x128xi1>, vector<8x128xf32>
    %c32_i32_61 = arith.constant 32 : i32
    %171 = tpu.dynamic_rotate %170 by %c32_i32_61 dim 1 : vector<8x128xf32>, i32 -> vector<8x128xf32>
    %c64_i32_62 = arith.constant 64 : i32
    %172 = tpu.dynamic_rotate %170 by %c64_i32_62 dim 1 : vector<8x128xf32>, i32 -> vector<8x128xf32>
    %c96_i32_63 = arith.constant 96 : i32
    %173 = tpu.dynamic_rotate %170 by %c96_i32_63 dim 1 : vector<8x128xf32>, i32 -> vector<8x128xf32>
    %174 = arith.mulf %170, %155 : vector<8x128xf32>
    %175 = arith.mulf %171, %173 : vector<8x128xf32>
    %176 = arith.addf %174, %175 : vector<8x128xf32>
    %177 = math.tanh %176 : vector<8x128xf32>
    %178 = arith.mulf %172, %177 : vector<8x128xf32>
    %179 = tpu.concatenate %31, %52, %73, %94, %115, %136, %157, %178 in 0 : vector<8x128xf32>, vector<8x128xf32>, vector<8x128xf32>, vector<8x128xf32>, vector<8x128xf32>, vector<8x128xf32>, vector<8x128xf32>, vector<8x128xf32> -> vector<64x128xf32>
    %180 = arith.truncf %179 : vector<64x128xf32> to vector<64x128xbf16>
    %c1 = arith.constant 1 : index
    %c0_64 = arith.constant 0 : index
    %c0_65 = arith.constant 0 : index
    %181 = vector.load %arg1[%c1, %c0_64, %c0_65] : memref<2x128x128xbf16, #tpu.memory_space<vmem>>, vector<1x128x128xbf16>
    %182 = vector.shape_cast %181 : vector<1x128x128xbf16> to vector<128x128xbf16>
    %c1_66 = arith.constant 1 : index
    %c0_67 = arith.constant 0 : index
    %c0_68 = arith.constant 0 : index
    %183 = vector.load %arg2[%c1_66, %c0_67, %c0_68] : memref<2x128x128xbf16, #tpu.memory_space<vmem>>, vector<1x128x128xbf16>
    %184 = vector.shape_cast %183 : vector<1x128x128xbf16> to vector<128x128xbf16>
    %c1_69 = arith.constant 1 : index
    %c0_70 = arith.constant 0 : index
    %c0_71 = arith.constant 0 : index
    %185 = vector.load %arg3[%c1_69, %c0_70, %c0_71] : memref<2x1x128xf32, #tpu.memory_space<vmem>>, vector<1x1x128xf32>
    %186 = vector.shape_cast %185 : vector<1x1x128xf32> to vector<1x128xf32>
    %cst_72 = arith.constant dense<0.000000e+00> : vector<64x128xf32>
    %187 = tpu.matmul %180, %182, %cst_72 {dimension_numbers = #tpu.dot_dimension_numbers<[1], [0], [0], [1], [0, 0, 1, 1], [], []>} : vector<64x128xbf16>, vector<128x128xbf16>, vector<64x128xf32> -> vector<64x128xf32>
    %188 = vector.broadcast %186 : vector<1x128xf32> to vector<64x128xf32>
    %189 = arith.addf %187, %188 : vector<64x128xf32>
    %cst_73 = arith.constant 0.000000e+00 : f32
    %190 = vector.broadcast %cst_73 : f32 to vector<8x128xf32>
    %191 = vector.extract_strided_slice %189 {offsets = [0, 0], sizes = [8, 128], strides = [1, 1]} : vector<64x128xf32> to vector<8x128xf32>
    %cst_74 = arith.constant 5.000000e-01 : f32
    %192 = vector.broadcast %cst_74 : f32 to vector<8x128xf32>
    %193 = arith.mulf %192, %191 : vector<8x128xf32>
    %194 = arith.select %2, %191, %193 : vector<8x128xi1>, vector<8x128xf32>
    %195 = math.tanh %194 : vector<8x128xf32>
    %cst_75 = arith.constant 5.000000e-01 : f32
    %196 = vector.broadcast %cst_75 : f32 to vector<8x128xf32>
    %197 = arith.mulf %196, %195 : vector<8x128xf32>
    %cst_76 = arith.constant 5.000000e-01 : f32
    %198 = vector.broadcast %cst_76 : f32 to vector<8x128xf32>
    %199 = arith.addf %197, %198 : vector<8x128xf32>
    %200 = arith.select %2, %195, %199 : vector<8x128xi1>, vector<8x128xf32>
    %c32_i32_77 = arith.constant 32 : i32
    %201 = tpu.dynamic_rotate %200 by %c32_i32_77 dim 1 : vector<8x128xf32>, i32 -> vector<8x128xf32>
    %c64_i32_78 = arith.constant 64 : i32
    %202 = tpu.dynamic_rotate %200 by %c64_i32_78 dim 1 : vector<8x128xf32>, i32 -> vector<8x128xf32>
    %c96_i32_79 = arith.constant 96 : i32
    %203 = tpu.dynamic_rotate %200 by %c96_i32_79 dim 1 : vector<8x128xf32>, i32 -> vector<8x128xf32>
    %204 = arith.mulf %200, %190 : vector<8x128xf32>
    %205 = arith.mulf %201, %203 : vector<8x128xf32>
    %206 = arith.addf %204, %205 : vector<8x128xf32>
    %207 = math.tanh %206 : vector<8x128xf32>
    %208 = arith.mulf %202, %207 : vector<8x128xf32>
    %209 = arith.truncf %208 : vector<8x128xf32> to vector<8x128xbf16>
    %cst_80 = arith.constant dense<0.000000e+00> : vector<8x128xf32>
    %210 = tpu.matmul %209, %184, %cst_80 {dimension_numbers = #tpu.dot_dimension_numbers<[1], [0], [0], [1], [0, 0, 1, 1], [], []>} : vector<8x128xbf16>, vector<128x128xbf16>, vector<8x128xf32> -> vector<8x128xf32>
    %211 = vector.extract_strided_slice %189 {offsets = [8, 0], sizes = [8, 128], strides = [1, 1]} : vector<64x128xf32> to vector<8x128xf32>
    %212 = arith.addf %211, %210 : vector<8x128xf32>
    %cst_81 = arith.constant 5.000000e-01 : f32
    %213 = vector.broadcast %cst_81 : f32 to vector<8x128xf32>
    %214 = arith.mulf %213, %212 : vector<8x128xf32>
    %215 = arith.select %2, %212, %214 : vector<8x128xi1>, vector<8x128xf32>
    %216 = math.tanh %215 : vector<8x128xf32>
    %cst_82 = arith.constant 5.000000e-01 : f32
    %217 = vector.broadcast %cst_82 : f32 to vector<8x128xf32>
    %218 = arith.mulf %217, %216 : vector<8x128xf32>
    %cst_83 = arith.constant 5.000000e-01 : f32
    %219 = vector.broadcast %cst_83 : f32 to vector<8x128xf32>
    %220 = arith.addf %218, %219 : vector<8x128xf32>
    %221 = arith.select %2, %216, %220 : vector<8x128xi1>, vector<8x128xf32>
    %c32_i32_84 = arith.constant 32 : i32
    %222 = tpu.dynamic_rotate %221 by %c32_i32_84 dim 1 : vector<8x128xf32>, i32 -> vector<8x128xf32>
    %c64_i32_85 = arith.constant 64 : i32
    %223 = tpu.dynamic_rotate %221 by %c64_i32_85 dim 1 : vector<8x128xf32>, i32 -> vector<8x128xf32>
    %c96_i32_86 = arith.constant 96 : i32
    %224 = tpu.dynamic_rotate %221 by %c96_i32_86 dim 1 : vector<8x128xf32>, i32 -> vector<8x128xf32>
    %225 = arith.mulf %221, %206 : vector<8x128xf32>
    %226 = arith.mulf %222, %224 : vector<8x128xf32>
    %227 = arith.addf %225, %226 : vector<8x128xf32>
    %228 = math.tanh %227 : vector<8x128xf32>
    %229 = arith.mulf %223, %228 : vector<8x128xf32>
    %230 = arith.truncf %229 : vector<8x128xf32> to vector<8x128xbf16>
    %cst_87 = arith.constant dense<0.000000e+00> : vector<8x128xf32>
    %231 = tpu.matmul %230, %184, %cst_87 {dimension_numbers = #tpu.dot_dimension_numbers<[1], [0], [0], [1], [0, 0, 1, 1], [], []>} : vector<8x128xbf16>, vector<128x128xbf16>, vector<8x128xf32> -> vector<8x128xf32>
    %232 = vector.extract_strided_slice %189 {offsets = [16, 0], sizes = [8, 128], strides = [1, 1]} : vector<64x128xf32> to vector<8x128xf32>
    %233 = arith.addf %232, %231 : vector<8x128xf32>
    %cst_88 = arith.constant 5.000000e-01 : f32
    %234 = vector.broadcast %cst_88 : f32 to vector<8x128xf32>
    %235 = arith.mulf %234, %233 : vector<8x128xf32>
    %236 = arith.select %2, %233, %235 : vector<8x128xi1>, vector<8x128xf32>
    %237 = math.tanh %236 : vector<8x128xf32>
    %cst_89 = arith.constant 5.000000e-01 : f32
    %238 = vector.broadcast %cst_89 : f32 to vector<8x128xf32>
    %239 = arith.mulf %238, %237 : vector<8x128xf32>
    %cst_90 = arith.constant 5.000000e-01 : f32
    %240 = vector.broadcast %cst_90 : f32 to vector<8x128xf32>
    %241 = arith.addf %239, %240 : vector<8x128xf32>
    %242 = arith.select %2, %237, %241 : vector<8x128xi1>, vector<8x128xf32>
    %c32_i32_91 = arith.constant 32 : i32
    %243 = tpu.dynamic_rotate %242 by %c32_i32_91 dim 1 : vector<8x128xf32>, i32 -> vector<8x128xf32>
    %c64_i32_92 = arith.constant 64 : i32
    %244 = tpu.dynamic_rotate %242 by %c64_i32_92 dim 1 : vector<8x128xf32>, i32 -> vector<8x128xf32>
    %c96_i32_93 = arith.constant 96 : i32
    %245 = tpu.dynamic_rotate %242 by %c96_i32_93 dim 1 : vector<8x128xf32>, i32 -> vector<8x128xf32>
    %246 = arith.mulf %242, %227 : vector<8x128xf32>
    %247 = arith.mulf %243, %245 : vector<8x128xf32>
    %248 = arith.addf %246, %247 : vector<8x128xf32>
    %249 = math.tanh %248 : vector<8x128xf32>
    %250 = arith.mulf %244, %249 : vector<8x128xf32>
    %251 = arith.truncf %250 : vector<8x128xf32> to vector<8x128xbf16>
    %cst_94 = arith.constant dense<0.000000e+00> : vector<8x128xf32>
    %252 = tpu.matmul %251, %184, %cst_94 {dimension_numbers = #tpu.dot_dimension_numbers<[1], [0], [0], [1], [0, 0, 1, 1], [], []>} : vector<8x128xbf16>, vector<128x128xbf16>, vector<8x128xf32> -> vector<8x128xf32>
    %253 = vector.extract_strided_slice %189 {offsets = [24, 0], sizes = [8, 128], strides = [1, 1]} : vector<64x128xf32> to vector<8x128xf32>
    %254 = arith.addf %253, %252 : vector<8x128xf32>
    %cst_95 = arith.constant 5.000000e-01 : f32
    %255 = vector.broadcast %cst_95 : f32 to vector<8x128xf32>
    %256 = arith.mulf %255, %254 : vector<8x128xf32>
    %257 = arith.select %2, %254, %256 : vector<8x128xi1>, vector<8x128xf32>
    %258 = math.tanh %257 : vector<8x128xf32>
    %cst_96 = arith.constant 5.000000e-01 : f32
    %259 = vector.broadcast %cst_96 : f32 to vector<8x128xf32>
    %260 = arith.mulf %259, %258 : vector<8x128xf32>
    %cst_97 = arith.constant 5.000000e-01 : f32
    %261 = vector.broadcast %cst_97 : f32 to vector<8x128xf32>
    %262 = arith.addf %260, %261 : vector<8x128xf32>
    %263 = arith.select %2, %258, %262 : vector<8x128xi1>, vector<8x128xf32>
    %c32_i32_98 = arith.constant 32 : i32
    %264 = tpu.dynamic_rotate %263 by %c32_i32_98 dim 1 : vector<8x128xf32>, i32 -> vector<8x128xf32>
    %c64_i32_99 = arith.constant 64 : i32
    %265 = tpu.dynamic_rotate %263 by %c64_i32_99 dim 1 : vector<8x128xf32>, i32 -> vector<8x128xf32>
    %c96_i32_100 = arith.constant 96 : i32
    %266 = tpu.dynamic_rotate %263 by %c96_i32_100 dim 1 : vector<8x128xf32>, i32 -> vector<8x128xf32>
    %267 = arith.mulf %263, %248 : vector<8x128xf32>
    %268 = arith.mulf %264, %266 : vector<8x128xf32>
    %269 = arith.addf %267, %268 : vector<8x128xf32>
    %270 = math.tanh %269 : vector<8x128xf32>
    %271 = arith.mulf %265, %270 : vector<8x128xf32>
    %272 = arith.truncf %271 : vector<8x128xf32> to vector<8x128xbf16>
    %cst_101 = arith.constant dense<0.000000e+00> : vector<8x128xf32>
    %273 = tpu.matmul %272, %184, %cst_101 {dimension_numbers = #tpu.dot_dimension_numbers<[1], [0], [0], [1], [0, 0, 1, 1], [], []>} : vector<8x128xbf16>, vector<128x128xbf16>, vector<8x128xf32> -> vector<8x128xf32>
    %274 = vector.extract_strided_slice %189 {offsets = [32, 0], sizes = [8, 128], strides = [1, 1]} : vector<64x128xf32> to vector<8x128xf32>
    %275 = arith.addf %274, %273 : vector<8x128xf32>
    %cst_102 = arith.constant 5.000000e-01 : f32
    %276 = vector.broadcast %cst_102 : f32 to vector<8x128xf32>
    %277 = arith.mulf %276, %275 : vector<8x128xf32>
    %278 = arith.select %2, %275, %277 : vector<8x128xi1>, vector<8x128xf32>
    %279 = math.tanh %278 : vector<8x128xf32>
    %cst_103 = arith.constant 5.000000e-01 : f32
    %280 = vector.broadcast %cst_103 : f32 to vector<8x128xf32>
    %281 = arith.mulf %280, %279 : vector<8x128xf32>
    %cst_104 = arith.constant 5.000000e-01 : f32
    %282 = vector.broadcast %cst_104 : f32 to vector<8x128xf32>
    %283 = arith.addf %281, %282 : vector<8x128xf32>
    %284 = arith.select %2, %279, %283 : vector<8x128xi1>, vector<8x128xf32>
    %c32_i32_105 = arith.constant 32 : i32
    %285 = tpu.dynamic_rotate %284 by %c32_i32_105 dim 1 : vector<8x128xf32>, i32 -> vector<8x128xf32>
    %c64_i32_106 = arith.constant 64 : i32
    %286 = tpu.dynamic_rotate %284 by %c64_i32_106 dim 1 : vector<8x128xf32>, i32 -> vector<8x128xf32>
    %c96_i32_107 = arith.constant 96 : i32
    %287 = tpu.dynamic_rotate %284 by %c96_i32_107 dim 1 : vector<8x128xf32>, i32 -> vector<8x128xf32>
    %288 = arith.mulf %284, %269 : vector<8x128xf32>
    %289 = arith.mulf %285, %287 : vector<8x128xf32>
    %290 = arith.addf %288, %289 : vector<8x128xf32>
    %291 = math.tanh %290 : vector<8x128xf32>
    %292 = arith.mulf %286, %291 : vector<8x128xf32>
    %293 = arith.truncf %292 : vector<8x128xf32> to vector<8x128xbf16>
    %cst_108 = arith.constant dense<0.000000e+00> : vector<8x128xf32>
    %294 = tpu.matmul %293, %184, %cst_108 {dimension_numbers = #tpu.dot_dimension_numbers<[1], [0], [0], [1], [0, 0, 1, 1], [], []>} : vector<8x128xbf16>, vector<128x128xbf16>, vector<8x128xf32> -> vector<8x128xf32>
    %295 = vector.extract_strided_slice %189 {offsets = [40, 0], sizes = [8, 128], strides = [1, 1]} : vector<64x128xf32> to vector<8x128xf32>
    %296 = arith.addf %295, %294 : vector<8x128xf32>
    %cst_109 = arith.constant 5.000000e-01 : f32
    %297 = vector.broadcast %cst_109 : f32 to vector<8x128xf32>
    %298 = arith.mulf %297, %296 : vector<8x128xf32>
    %299 = arith.select %2, %296, %298 : vector<8x128xi1>, vector<8x128xf32>
    %300 = math.tanh %299 : vector<8x128xf32>
    %cst_110 = arith.constant 5.000000e-01 : f32
    %301 = vector.broadcast %cst_110 : f32 to vector<8x128xf32>
    %302 = arith.mulf %301, %300 : vector<8x128xf32>
    %cst_111 = arith.constant 5.000000e-01 : f32
    %303 = vector.broadcast %cst_111 : f32 to vector<8x128xf32>
    %304 = arith.addf %302, %303 : vector<8x128xf32>
    %305 = arith.select %2, %300, %304 : vector<8x128xi1>, vector<8x128xf32>
    %c32_i32_112 = arith.constant 32 : i32
    %306 = tpu.dynamic_rotate %305 by %c32_i32_112 dim 1 : vector<8x128xf32>, i32 -> vector<8x128xf32>
    %c64_i32_113 = arith.constant 64 : i32
    %307 = tpu.dynamic_rotate %305 by %c64_i32_113 dim 1 : vector<8x128xf32>, i32 -> vector<8x128xf32>
    %c96_i32_114 = arith.constant 96 : i32
    %308 = tpu.dynamic_rotate %305 by %c96_i32_114 dim 1 : vector<8x128xf32>, i32 -> vector<8x128xf32>
    %309 = arith.mulf %305, %290 : vector<8x128xf32>
    %310 = arith.mulf %306, %308 : vector<8x128xf32>
    %311 = arith.addf %309, %310 : vector<8x128xf32>
    %312 = math.tanh %311 : vector<8x128xf32>
    %313 = arith.mulf %307, %312 : vector<8x128xf32>
    %314 = arith.truncf %313 : vector<8x128xf32> to vector<8x128xbf16>
    %cst_115 = arith.constant dense<0.000000e+00> : vector<8x128xf32>
    %315 = tpu.matmul %314, %184, %cst_115 {dimension_numbers = #tpu.dot_dimension_numbers<[1], [0], [0], [1], [0, 0, 1, 1], [], []>} : vector<8x128xbf16>, vector<128x128xbf16>, vector<8x128xf32> -> vector<8x128xf32>
    %316 = vector.extract_strided_slice %189 {offsets = [48, 0], sizes = [8, 128], strides = [1, 1]} : vector<64x128xf32> to vector<8x128xf32>
    %317 = arith.addf %316, %315 : vector<8x128xf32>
    %cst_116 = arith.constant 5.000000e-01 : f32
    %318 = vector.broadcast %cst_116 : f32 to vector<8x128xf32>
    %319 = arith.mulf %318, %317 : vector<8x128xf32>
    %320 = arith.select %2, %317, %319 : vector<8x128xi1>, vector<8x128xf32>
    %321 = math.tanh %320 : vector<8x128xf32>
    %cst_117 = arith.constant 5.000000e-01 : f32
    %322 = vector.broadcast %cst_117 : f32 to vector<8x128xf32>
    %323 = arith.mulf %322, %321 : vector<8x128xf32>
    %cst_118 = arith.constant 5.000000e-01 : f32
    %324 = vector.broadcast %cst_118 : f32 to vector<8x128xf32>
    %325 = arith.addf %323, %324 : vector<8x128xf32>
    %326 = arith.select %2, %321, %325 : vector<8x128xi1>, vector<8x128xf32>
    %c32_i32_119 = arith.constant 32 : i32
    %327 = tpu.dynamic_rotate %326 by %c32_i32_119 dim 1 : vector<8x128xf32>, i32 -> vector<8x128xf32>
    %c64_i32_120 = arith.constant 64 : i32
    %328 = tpu.dynamic_rotate %326 by %c64_i32_120 dim 1 : vector<8x128xf32>, i32 -> vector<8x128xf32>
    %c96_i32_121 = arith.constant 96 : i32
    %329 = tpu.dynamic_rotate %326 by %c96_i32_121 dim 1 : vector<8x128xf32>, i32 -> vector<8x128xf32>
    %330 = arith.mulf %326, %311 : vector<8x128xf32>
    %331 = arith.mulf %327, %329 : vector<8x128xf32>
    %332 = arith.addf %330, %331 : vector<8x128xf32>
    %333 = math.tanh %332 : vector<8x128xf32>
    %334 = arith.mulf %328, %333 : vector<8x128xf32>
    %335 = arith.truncf %334 : vector<8x128xf32> to vector<8x128xbf16>
    %cst_122 = arith.constant dense<0.000000e+00> : vector<8x128xf32>
    %336 = tpu.matmul %335, %184, %cst_122 {dimension_numbers = #tpu.dot_dimension_numbers<[1], [0], [0], [1], [0, 0, 1, 1], [], []>} : vector<8x128xbf16>, vector<128x128xbf16>, vector<8x128xf32> -> vector<8x128xf32>
    %337 = vector.extract_strided_slice %189 {offsets = [56, 0], sizes = [8, 128], strides = [1, 1]} : vector<64x128xf32> to vector<8x128xf32>
    %338 = arith.addf %337, %336 : vector<8x128xf32>
    %cst_123 = arith.constant 5.000000e-01 : f32
    %339 = vector.broadcast %cst_123 : f32 to vector<8x128xf32>
    %340 = arith.mulf %339, %338 : vector<8x128xf32>
    %341 = arith.select %2, %338, %340 : vector<8x128xi1>, vector<8x128xf32>
    %342 = math.tanh %341 : vector<8x128xf32>
    %cst_124 = arith.constant 5.000000e-01 : f32
    %343 = vector.broadcast %cst_124 : f32 to vector<8x128xf32>
    %344 = arith.mulf %343, %342 : vector<8x128xf32>
    %cst_125 = arith.constant 5.000000e-01 : f32
    %345 = vector.broadcast %cst_125 : f32 to vector<8x128xf32>
    %346 = arith.addf %344, %345 : vector<8x128xf32>
    %347 = arith.select %2, %342, %346 : vector<8x128xi1>, vector<8x128xf32>
    %c32_i32_126 = arith.constant 32 : i32
    %348 = tpu.dynamic_rotate %347 by %c32_i32_126 dim 1 : vector<8x128xf32>, i32 -> vector<8x128xf32>
    %c64_i32_127 = arith.constant 64 : i32
    %349 = tpu.dynamic_rotate %347 by %c64_i32_127 dim 1 : vector<8x128xf32>, i32 -> vector<8x128xf32>
    %c96_i32_128 = arith.constant 96 : i32
    %350 = tpu.dynamic_rotate %347 by %c96_i32_128 dim 1 : vector<8x128xf32>, i32 -> vector<8x128xf32>
    %351 = arith.mulf %347, %332 : vector<8x128xf32>
    %352 = arith.mulf %348, %350 : vector<8x128xf32>
    %353 = arith.addf %351, %352 : vector<8x128xf32>
    %354 = math.tanh %353 : vector<8x128xf32>
    %355 = arith.mulf %349, %354 : vector<8x128xf32>
    %356 = arith.truncf %355 : vector<8x128xf32> to vector<8x128xbf16>
    %c0_129 = arith.constant 0 : index
    %c0_130 = arith.constant 0 : index
    %357 = vector.load %arg4[%c0_129, %c0_130] : memref<128x128xbf16, #tpu.memory_space<vmem>>, vector<128x128xbf16>
    %cst_131 = arith.constant dense<0.000000e+00> : vector<8x128xf32>
    %358 = tpu.matmul %356, %357, %cst_131 {dimension_numbers = #tpu.dot_dimension_numbers<[1], [0], [0], [1], [0, 0, 1, 1], [], []>} : vector<8x128xbf16>, vector<128x128xbf16>, vector<8x128xf32> -> vector<8x128xf32>
    %c0_132 = arith.constant 0 : index
    %c0_133 = arith.constant 0 : index
    %359 = vector.load %arg5[%c0_132, %c0_133] : memref<1x128xf32, #tpu.memory_space<vmem>>, vector<1x128xf32>
    %360 = vector.broadcast %359 : vector<1x128xf32> to vector<8x128xf32>
    %361 = arith.addf %358, %360 : vector<8x128xf32>
    %cst_134 = arith.constant 0.000000e+00 : f32
    %362 = vector.broadcast %cst_134 : f32 to vector<8x128xf32>
    %363 = arith.maximumf %361, %362 : vector<8x128xf32>
    %364 = arith.truncf %363 : vector<8x128xf32> to vector<8x128xbf16>
    %c0_135 = arith.constant 0 : index
    %c0_136 = arith.constant 0 : index
    %365 = vector.load %arg6[%c0_135, %c0_136] : memref<128x128xbf16, #tpu.memory_space<vmem>>, vector<128x128xbf16>
    %cst_137 = arith.constant dense<0.000000e+00> : vector<8x128xf32>
    %366 = tpu.matmul %364, %365, %cst_137 {dimension_numbers = #tpu.dot_dimension_numbers<[1], [0], [0], [1], [0, 0, 1, 1], [], []>} : vector<8x128xbf16>, vector<128x128xbf16>, vector<8x128xf32> -> vector<8x128xf32>
    %c0_138 = arith.constant 0 : index
    %c0_139 = arith.constant 0 : index
    %367 = vector.load %arg7[%c0_138, %c0_139] : memref<1x128xf32, #tpu.memory_space<vmem>>, vector<1x128xf32>
    %368 = vector.broadcast %367 : vector<1x128xf32> to vector<8x128xf32>
    %369 = arith.addf %366, %368 : vector<8x128xf32>
    %cst_140 = arith.constant 0.000000e+00 : f32
    %370 = vector.broadcast %cst_140 : f32 to vector<8x128xf32>
    %371 = arith.maximumf %369, %370 : vector<8x128xf32>
    %c0_141 = arith.constant 0 : index
    %c0_142 = arith.constant 0 : index
    %372 = vector.load %arg8[%c0_141, %c0_142] : memref<8x128xf32, #tpu.memory_space<vmem>>, vector<8x128xf32>
    tpu.vector_store %arg8[%c0_141, %c0_142], %371 {strides = array<i32>} : memref<8x128xf32, #tpu.memory_space<vmem>>, vector<8x128xf32>,
    return
  }
}

</mosaic_0001>

<llo_original>
// kernel: tpu_custom_call.1
$region0: #{tpu_custom_call.1}
  #allocation0 [shape = 'u32[]', space=smem, size = 0x4, offset = 0x4, fixed_abs, tag = 'smem constant byte address 0x4 - core index']
  #allocation1 [shape = 'u32[72,128]{1,0:T(1,128)}', space=vmem, size = 0x9000, scoped, tag = 'internal scratch']
  %s0 = inlined_call_operand.hbm [shape: bf16[64,128], index: 0, kind: input, shape index: {}]
  %s1 = inlined_call_operand.hbm [shape: bf16[2,128,128], index: 1, kind: input, shape index: {}]
  %s2 = inlined_call_operand.hbm [shape: bf16[2,128,128], index: 2, kind: input, shape index: {}]
  %s3 = inlined_call_operand.vmem [shape: f32[2,1,128], index: 3, kind: input, shape index: {}]
  %s4 = inlined_call_operand.hbm [shape: bf16[128,128], index: 4, kind: input, shape index: {}]
  %s5 = inlined_call_operand.vmem [shape: f32[1,128], index: 5, kind: input, shape index: {}]
  %s6 = inlined_call_operand.hbm [shape: bf16[128,128], index: 6, kind: input, shape index: {}]
  %s7 = inlined_call_operand.vmem [shape: f32[1,128], index: 7, kind: input, shape index: {}]
  %s8 = inlined_call_operand.hbm [shape: f32[8,128], index: 8, kind: output, shape index: {}]
  %s9 = sld [smem:[#allocation0]]
  $region62: #{tpu_custom_call.1} parent=0
    _
  %s11 = ssub.s32 1, %s9
  %s12 = scalar_select 0, %s11, %s9
  $region1: #{tpu_custom_call.1} parent=0
    #allocation2 [shape = 'u8[16384]{0}', space=vmem, size = 0x4000, scoped, tag = 'input window, operand 0, single buffered']
    #allocation3 [shape = 's32[1]{0}', space=sflag, size = 0x4, scoped, tag = 'scoped memory for tpu_custom_call.1']
    #allocation4 [shape = 's32[1]{0}', space=sflag, size = 0x4, scoped, tag = 'scoped memory for tpu_custom_call.1']
    #allocation5 [shape = 'u8[65536]{0}', space=vmem, size = 0x10000, scoped, tag = 'input window, operand 1, single buffered']
    #allocation6 [shape = 's32[1]{0}', space=sflag, size = 0x4, scoped, tag = 'scoped memory for tpu_custom_call.1']
    #allocation7 [shape = 'u8[65536]{0}', space=vmem, size = 0x10000, scoped, tag = 'input window, operand 2, single buffered']
    #allocation8 [shape = 'u8[32768]{0}', space=vmem, size = 0x8000, scoped, tag = 'input window, operand 4, single buffered']
    #allocation9 [shape = 's32[1]{0}', space=sflag, size = 0x4, scoped, tag = 'scoped memory for tpu_custom_call.1']
    #allocation10 [shape = 'u8[32768]{0}', space=vmem, size = 0x8000, scoped, tag = 'input window, operand 6, single buffered']
    #allocation11 [shape = 'u8[4096]{0}', space=vmem, size = 0x1000, scoped, tag = 'output window, operand 0, single buffered']
    %13 = vsyncpa [#allocation3], 0
    %14 = vsyncpa [#allocation6], 0
    %15 = vsyncpa [#allocation9], 0
    %16 = vsyncpa [#allocation4], 0
    // Predicated region
    $region2: #{tpu_custom_call.1} parent=1 // pred_check
      _
    $region3: #{tpu_custom_call.1} parent=1 // pred_check_branch
      %18 = sbr.rel (0) target = $region5
    $region4: #{tpu_custom_call.1} parent=1 // pred_region
      %20 = vsyncadd [#allocation3], 0
      %s21 = sshll.u32 %s0, 4
      %s22 = int_to_ptr.hbm [resolvable:$true] %s21
      %s23 = sshll.u32 [#allocation2], 4
      %s24 = int_to_ptr.vmem [resolvable:$true] %s23
      %29 = dma.hbm_to_vmem [thread:$0]  %s22, 512, %s24, [#allocation3], 64, 64, 4
    $region5: #{tpu_custom_call.1} parent=1 // pred_fallthru
      _
    // Predicated region
    $region6: #{tpu_custom_call.1} parent=1 // pred_check
      _
    $region7: #{tpu_custom_call.1} parent=1 // pred_check_branch
      %31 = sbr.rel (0) target = $region9
    $region8: #{tpu_custom_call.1} parent=1 // pred_region
      %33 = vsyncadd [#allocation6], 0
      %s34 = sshll.u32 %s1, 4
      %s35 = int_to_ptr.hbm [resolvable:$true] %s34
      %s36 = sshll.u32 [#allocation5], 4
      %s37 = int_to_ptr.vmem [resolvable:$true] %s36
      %42 = dma.hbm_to_vmem [thread:$0]  %s35, 2048, %s37, [#allocation6], 64, 64, 4
    $region9: #{tpu_custom_call.1} parent=1 // pred_fallthru
      _
    // Predicated region
    $region10: #{tpu_custom_call.1} parent=1 // pred_check
      _
    $region11: #{tpu_custom_call.1} parent=1 // pred_check_branch
      %44 = sbr.rel (0) target = $region13
    $region12: #{tpu_custom_call.1} parent=1 // pred_region
      %46 = vsyncadd [#allocation6], 0
      %s47 = sshll.u32 %s2, 4
      %s48 = int_to_ptr.hbm [resolvable:$true] %s47
      %s49 = sshll.u32 [#allocation7], 4
      %s50 = int_to_ptr.vmem [resolvable:$true] %s49
      %55 = dma.hbm_to_vmem [thread:$0]  %s48, 2048, %s50, [#allocation6], 64, 64, 4
    $region13: #{tpu_custom_call.1} parent=1 // pred_fallthru
      _
    // Predicated region
    $region14: #{tpu_custom_call.1} parent=1 // pred_check
      _
    $region15: #{tpu_custom_call.1} parent=1 // pred_check_branch
      %57 = sbr.rel (0) target = $region17
    $region16: #{tpu_custom_call.1} parent=1 // pred_region
      _
    $region17: #{tpu_custom_call.1} parent=1 // pred_fallthru
      _
    // Predicated region
    $region18: #{tpu_custom_call.1} parent=1 // pred_check
      _
    $region19: #{tpu_custom_call.1} parent=1 // pred_check_branch
      %59 = sbr.rel (0) target = $region21
    $region20: #{tpu_custom_call.1} parent=1 // pred_region
      %61 = vsyncadd [#allocation9], 0
      %s62 = sshll.u32 %s4, 4
      %s63 = int_to_ptr.hbm [resolvable:$true] %s62
      %s64 = sshll.u32 [#allocation8], 4
      %s65 = int_to_ptr.vmem [resolvable:$true] %s64
      %70 = dma.hbm_to_vmem [thread:$0]  %s63, 1024, %s65, [#allocation9], 64, 64, 4
    $region21: #{tpu_custom_call.1} parent=1 // pred_fallthru
      _
    // Predicated region
    $region22: #{tpu_custom_call.1} parent=1 // pred_check
      _
    $region23: #{tpu_custom_call.1} parent=1 // pred_check_branch
      %72 = sbr.rel (0) target = $region25
    $region24: #{tpu_custom_call.1} parent=1 // pred_region
      _
    $region25: #{tpu_custom_call.1} parent=1 // pred_fallthru
      _
    // Predicated region
    $region26: #{tpu_custom_call.1} parent=1 // pred_check
      _
    $region27: #{tpu_custom_call.1} parent=1 // pred_check_branch
      %74 = sbr.rel (0) target = $region29
    $region28: #{tpu_custom_call.1} parent=1 // pred_region
      %76 = vsyncadd [#allocation9], 0
      %s77 = sshll.u32 %s6, 4
      %s78 = int_to_ptr.hbm [resolvable:$true] %s77
      %s79 = sshll.u32 [#allocation10], 4
      %s80 = int_to_ptr.vmem [resolvable:$true] %s79
      %85 = dma.hbm_to_vmem [thread:$0]  %s78, 1024, %s80, [#allocation9], 64, 64, 4
    $region29: #{tpu_custom_call.1} parent=1 // pred_fallthru
      _
    // Predicated region
    $region30: #{tpu_custom_call.1} parent=1 // pred_check
      _
    $region31: #{tpu_custom_call.1} parent=1 // pred_check_branch
      %87 = sbr.rel (0) target = $region33
    $region32: #{tpu_custom_call.1} parent=1 // pred_region
      _
    $region33: #{tpu_custom_call.1} parent=1 // pred_fallthru
      _
    // Predicated region
    $region34: #{tpu_custom_call.1} parent=1 // pred_check
      _
    $region35: #{tpu_custom_call.1} parent=1 // pred_check_branch
      %89 = sbr.rel (0) target = $region37
    $region36: #{tpu_custom_call.1} parent=1 // pred_region
      %91 = dma.done [#allocation3], 512
    $region37: #{tpu_custom_call.1} parent=1 // pred_fallthru
      _
    // Predicated region
    $region38: #{tpu_custom_call.1} parent=1 // pred_check
      _
    $region39: #{tpu_custom_call.1} parent=1 // pred_check_branch
      %93 = sbr.rel (0) target = $region41
    $region40: #{tpu_custom_call.1} parent=1 // pred_region
      %95 = dma.done [#allocation6], 2048
    $region41: #{tpu_custom_call.1} parent=1 // pred_fallthru
      _
    // Predicated region
    $region42: #{tpu_custom_call.1} parent=1 // pred_check
      _
    $region43: #{tpu_custom_call.1} parent=1 // pred_check_branch
      %97 = sbr.rel (0) target = $region45
    $region44: #{tpu_custom_call.1} parent=1 // pred_region
      %99 = dma.done [#allocation6], 2048
    $region45: #{tpu_custom_call.1} parent=1 // pred_fallthru
      _
    // Predicated region
    $region46: #{tpu_custom_call.1} parent=1 // pred_check
      _
    $region47: #{tpu_custom_call.1} parent=1 // pred_check_branch
      %101 = sbr.rel (0) target = $region49
    $region48: #{tpu_custom_call.1} parent=1 // pred_region
      %103 = dma.done [#allocation9], 1024
    $region49: #{tpu_custom_call.1} parent=1 // pred_fallthru
      _
    // Predicated region
    $region50: #{tpu_custom_call.1} parent=1 // pred_check
      _
    $region51: #{tpu_custom_call.1} parent=1 // pred_check_branch
      %105 = sbr.rel (0) target = $region53
    $region52: #{tpu_custom_call.1} parent=1 // pred_region
      %107 = dma.done [#allocation9], 1024
    $region53: #{tpu_custom_call.1} parent=1 // pred_fallthru
      _
    %v108 = vlaneseq
    %v109 = vand.u32 %v108, 127
    %vm110 = vcmp.ge.s32.totalorder %v109, 96
    %v111 = vld [vmem:[#allocation2] sm:$0xf]
    %v112 = vld [vmem:[#allocation2 + $0x4] sm:$0xf]
    %v113 = vld [vmem:[#allocation2 + $0x8] sm:$0xf]
    %v114 = vld [vmem:[#allocation2 + $0xc] sm:$0xf]
    %v115 = vld [vmem:[#allocation2 + $0x10] sm:$0xf]
    %v116 = vld [vmem:[#allocation2 + $0x14] sm:$0xf]
    %v117 = vld [vmem:[#allocation2 + $0x18] sm:$0xf]
    %v118 = vld [vmem:[#allocation2 + $0x1c] sm:$0xf]
    %v119 = vld [vmem:[#allocation5] sm:$0xf]
    %v120 = vld [vmem:[#allocation5 + $0x4] sm:$0xf]
    %v121 = vld [vmem:[#allocation5 + $0x8] sm:$0xf]
    %v122 = vld [vmem:[#allocation5 + $0xc] sm:$0xf]
    %v123 = vld [vmem:[#allocation5 + $0x10] sm:$0xf]
    %v124 = vld [vmem:[#allocation5 + $0x14] sm:$0xf]
    %v125 = vld [vmem:[#allocation5 + $0x18] sm:$0xf]
    %v126 = vld [vmem:[#allocation5 + $0x1c] sm:$0xf]
    %v127 = vld [vmem:[#allocation5 + $0x20] sm:$0xf]
    %v128 = vld [vmem:[#allocation5 + $0x24] sm:$0xf]
    %v129 = vld [vmem:[#allocation5 + $0x28] sm:$0xf]
    %v130 = vld [vmem:[#allocation5 + $0x2c] sm:$0xf]
    %v131 = vld [vmem:[#allocation5 + $0x30] sm:$0xf]
    %v132 = vld [vmem:[#allocation5 + $0x34] sm:$0xf]
    %v133 = vld [vmem:[#allocation5 + $0x38] sm:$0xf]
    %v134 = vld [vmem:[#allocation5 + $0x3c] sm:$0xf]
    %v135 = vld [vmem:[#allocation7] sm:$0xf]
    %v136 = vld [vmem:[#allocation7 + $0x4] sm:$0xf]
    %v137 = vld [vmem:[#allocation7 + $0x8] sm:$0xf]
    %v138 = vld [vmem:[#allocation7 + $0xc] sm:$0xf]
    %v139 = vld [vmem:[#allocation7 + $0x10] sm:$0xf]
    %v140 = vld [vmem:[#allocation7 + $0x14] sm:$0xf]
    %v141 = vld [vmem:[#allocation7 + $0x18] sm:$0xf]
    %v142 = vld [vmem:[#allocation7 + $0x1c] sm:$0xf]
    %v143 = vld [vmem:[#allocation7 + $0x20] sm:$0xf]
    %v144 = vld [vmem:[#allocation7 + $0x24] sm:$0xf]
    %v145 = vld [vmem:[#allocation7 + $0x28] sm:$0xf]
    %v146 = vld [vmem:[#allocation7 + $0x2c] sm:$0xf]
    %v147 = vld [vmem:[#allocation7 + $0x30] sm:$0xf]
    %v148 = vld [vmem:[#allocation7 + $0x34] sm:$0xf]
    %v149 = vld [vmem:[#allocation7 + $0x38] sm:$0xf]
    %v150 = vld [vmem:[#allocation7 + $0x3c] sm:$0xf]
    %v151 = vld [vmem:[%s3] sm:$0x1]
    %v153 = vperm.slane %v151, 0
    %v163 = vunpack.c.l.b16 %v111
    %v164 = vunpack.c.l.b16 %v112
    %v165 = vunpack.c.l.b16 %v113
    %v166 = vunpack.c.l.b16 %v114
    %v167 = vunpack.c.l.b16 %v115
    %v168 = vunpack.c.l.b16 %v116
    %v169 = vunpack.c.l.b16 %v117
    %v170 = vunpack.c.l.b16 %v118
    %v171 = vpack.c.b16 %v164, %v163
    %v172 = vpack.c.b16 %v166, %v165
    %v173 = vpack.c.b16 %v168, %v167
    %v174 = vpack.c.b16 %v170, %v169
    %v195 = vunpack.c.l.b16 %v119
    %v196 = vunpack.c.l.b16 %v120
    %v197 = vunpack.c.l.b16 %v121
    %v198 = vunpack.c.l.b16 %v122
    %v199 = vunpack.c.l.b16 %v123
    %v200 = vunpack.c.l.b16 %v124
    %v201 = vunpack.c.l.b16 %v125
    %v202 = vunpack.c.l.b16 %v126
    %v203 = vunpack.c.l.b16 %v127
    %v204 = vunpack.c.l.b16 %v128
    %v205 = vunpack.c.l.b16 %v129
    %v206 = vunpack.c.l.b16 %v130
    %v207 = vunpack.c.l.b16 %v131
    %v208 = vunpack.c.l.b16 %v132
    %v209 = vunpack.c.l.b16 %v133
    %v210 = vunpack.c.l.b16 %v134
    %v211 = vpack.c.b16 %v196, %v195
    %v212 = vpack.c.b16 %v198, %v197
    %v213 = vpack.c.b16 %v200, %v199
    %v214 = vpack.c.b16 %v202, %v201
    %v215 = vpack.c.b16 %v204, %v203
    %v216 = vpack.c.b16 %v206, %v205
    %v217 = vpack.c.b16 %v208, %v207
    %v218 = vpack.c.b16 %v210, %v209
    %227 = vmatpush.bf16.msra.mxu0 %v218
    %228 = vmatpush.bf16.msra.mxu0 %v217
    %229 = vmatpush.bf16.msra.mxu0 %v216
    %230 = vmatpush.bf16.msra.mxu0 %v215
    %231 = vmatpush.bf16.msra.mxu0 %v214
    %232 = vmatpush.bf16.msra.mxu0 %v213
    %233 = vmatpush.bf16.msra.mxu0 %v212
    %234 = vmatpush.bf16.msra.mxu0 %v211
    %235 = vmatmul.bf16.gmra.mxu0 %v171
    %v236 = vpop.f32.mrf.mxu0
    %v237 = vadd.f32 %v153, %v236
    %v238 = vpop.f32.mrf.mxu0
    %v239 = vadd.f32 %v153, %v238
    %240 = vmatmul.bf16.gmra.mxu0 %v172
    %v241 = vpop.f32.mrf.mxu0
    %v242 = vadd.f32 %v153, %v241
    %v243 = vpop.f32.mrf.mxu0
    %v244 = vadd.f32 %v153, %v243
    %245 = vmatmul.bf16.gmra.mxu0 %v173
    %v246 = vpop.f32.mrf.mxu0
    %v247 = vadd.f32 %v153, %v246
    %v248 = vpop.f32.mrf.mxu0
    %v249 = vadd.f32 %v153, %v248
    %250 = vmatmul.bf16.gmra.mxu0 %v174
    %v251 = vpop.f32.mrf.mxu0
    %v252 = vadd.f32 %v153, %v251
    %v253 = vpop.f32.mrf.mxu0
    %v254 = vadd.f32 %v153, %v253
    %255 = vdwg.mxu0
    %v256 = vmul.f32 %v237, 0.5
    %v257 = vsel %vm110, %v237, %v256
    %v258 = vtanh.pop %v257
    %v259 = vmul.f32 %v258, 0.5
    %v260 = vadd.f32 %v259, 0.5
    %v261 = vsel %vm110, %v258, %v260
    %262 = vrot.lane.b32.xlu0 %v261, 32
    %v263 = vpop.permute.xlu0 %262
    %264 = vrot.lane.b32.xlu0 %v261, 64
    %v265 = vpop.permute.xlu0 %264
    %266 = vrot.lane.b32.xlu0 %v261, 96
    %v267 = vpop.permute.xlu0 %266
    %v268 = vmul.f32 %v261, 0.0
    %v269 = vmul.f32 %v263, %v267
    %v270 = vadd.f32 %v268, %v269
    %v271 = vtanh.pop %v270
    %v272 = vmul.f32 %v265, %v271
    %v273 = vpack.c.bf16 %v272, %v272
    %v290 = vunpack.c.l.b16 %v135
    %v291 = vunpack.c.l.b16 %v136
    %v292 = vunpack.c.l.b16 %v137
    %v293 = vunpack.c.l.b16 %v138
    %v294 = vunpack.c.l.b16 %v139
    %v295 = vunpack.c.l.b16 %v140
    %v296 = vunpack.c.l.b16 %v141
    %v297 = vunpack.c.l.b16 %v142
    %v298 = vunpack.c.l.b16 %v143
    %v299 = vunpack.c.l.b16 %v144
    %v300 = vunpack.c.l.b16 %v145
    %v301 = vunpack.c.l.b16 %v146
    %v302 = vunpack.c.l.b16 %v147
    %v303 = vunpack.c.l.b16 %v148
    %v304 = vunpack.c.l.b16 %v149
    %v305 = vunpack.c.l.b16 %v150
    %v306 = vpack.c.b16 %v291, %v290
    %v307 = vpack.c.b16 %v293, %v292
    %v308 = vpack.c.b16 %v295, %v294
    %v309 = vpack.c.b16 %v297, %v296
    %v310 = vpack.c.b16 %v299, %v298
    %v311 = vpack.c.b16 %v301, %v300
    %v312 = vpack.c.b16 %v303, %v302
    %v313 = vpack.c.b16 %v305, %v304
    %322 = vmatpush.bf16.msra.mxu0 %v313
    %323 = vmatpush.bf16.msra.mxu0 %v312
    %324 = vmatpush.bf16.msra.mxu0 %v311
    %325 = vmatpush.bf16.msra.mxu0 %v310
    %326 = vmatpush.bf16.msra.mxu0 %v309
    %327 = vmatpush.bf16.msra.mxu0 %v308
    %328 = vmatpush.bf16.msra.mxu0 %v307
    %329 = vmatpush.bf16.msra.mxu0 %v306
    %330 = vmatmul.bf16.gmra.mxu0 %v273
    %v331 = vpop.f32.mrf.mxu0
    %v332 = vadd.f32 0.0, %v331
    %v333 = vpop.f32.mrf.mxu0
    %334 = vdwg.mxu0
    %v335 = vadd.f32 %v239, %v332
    %v336 = vmul.f32 %v335, 0.5
    %v337 = vsel %vm110, %v335, %v336
    %v338 = vtanh.pop %v337
    %v339 = vmul.f32 %v338, 0.5
    %v340 = vadd.f32 %v339, 0.5
    %v341 = vsel %vm110, %v338, %v340
    %342 = vrot.lane.b32.xlu0 %v341, 32
    %v343 = vpop.permute.xlu0 %342
    %344 = vrot.lane.b32.xlu0 %v341, 64
    %v345 = vpop.permute.xlu0 %344
    %346 = vrot.lane.b32.xlu0 %v341, 96
    %v347 = vpop.permute.xlu0 %346
    %v348 = vmul.f32 %v341, %v270
    %v349 = vmul.f32 %v343, %v347
    %v350 = vadd.f32 %v348, %v349
    %v351 = vtanh.pop %v350
    %v352 = vmul.f32 %v345, %v351
    %v353 = vpack.c.bf16 %v352, %v352
    %354 = vmatpush.bf16.msra.mxu0 %v313
    %355 = vmatpush.bf16.msra.mxu0 %v312
    %356 = vmatpush.bf16.msra.mxu0 %v311
    %357 = vmatpush.bf16.msra.mxu0 %v310
    %358 = vmatpush.bf16.msra.mxu0 %v309
    %359 = vmatpush.bf16.msra.mxu0 %v308
    %360 = vmatpush.bf16.msra.mxu0 %v307
    %361 = vmatpush.bf16.msra.mxu0 %v306
    %362 = vmatmul.bf16.gmra.mxu0 %v353
    %v363 = vpop.f32.mrf.mxu0
    %v364 = vadd.f32 0.0, %v363
    %v365 = vpop.f32.mrf.mxu0
    %366 = vdwg.mxu0
    %v367 = vadd.f32 %v242, %v364
    %v368 = vmul.f32 %v367, 0.5
    %v369 = vsel %vm110, %v367, %v368
    %v370 = vtanh.pop %v369
    %v371 = vmul.f32 %v370, 0.5
    %v372 = vadd.f32 %v371, 0.5
    %v373 = vsel %vm110, %v370, %v372
    %374 = vrot.lane.b32.xlu0 %v373, 32
    %v375 = vpop.permute.xlu0 %374
    %376 = vrot.lane.b32.xlu0 %v373, 64
    %v377 = vpop.permute.xlu0 %376
    %378 = vrot.lane.b32.xlu0 %v373, 96
    %v379 = vpop.permute.xlu0 %378
    %v380 = vmul.f32 %v373, %v350
    %v381 = vmul.f32 %v375, %v379
    %v382 = vadd.f32 %v380, %v381
    %v383 = vtanh.pop %v382
    %v384 = vmul.f32 %v377, %v383
    %v385 = vpack.c.bf16 %v384, %v384
    %386 = vmatpush.bf16.msra.mxu0 %v313
    %387 = vmatpush.bf16.msra.mxu0 %v312
    %388 = vmatpush.bf16.msra.mxu0 %v311
    %389 = vmatpush.bf16.msra.mxu0 %v310
    %390 = vmatpush.bf16.msra.mxu0 %v309
    %391 = vmatpush.bf16.msra.mxu0 %v308
    %392 = vmatpush.bf16.msra.mxu0 %v307
    %393 = vmatpush.bf16.msra.mxu0 %v306
    %394 = vmatmul.bf16.gmra.mxu0 %v385
    %v395 = vpop.f32.mrf.mxu0
    %v396 = vadd.f32 0.0, %v395
    %v397 = vpop.f32.mrf.mxu0
    %398 = vdwg.mxu0
    %v399 = vadd.f32 %v244, %v396
    %v400 = vmul.f32 %v399, 0.5
    %v401 = vsel %vm110, %v399, %v400
    %v402 = vtanh.pop %v401
    %v403 = vmul.f32 %v402, 0.5
    %v404 = vadd.f32 %v403, 0.5
    %v405 = vsel %vm110, %v402, %v404
    %406 = vrot.lane.b32.xlu0 %v405, 32
    %v407 = vpop.permute.xlu0 %406
    %408 = vrot.lane.b32.xlu0 %v405, 64
    %v409 = vpop.permute.xlu0 %408
    %410 = vrot.lane.b32.xlu0 %v405, 96
    %v411 = vpop.permute.xlu0 %410
    %v412 = vmul.f32 %v405, %v382
    %v413 = vmul.f32 %v407, %v411
    %v414 = vadd.f32 %v412, %v413
    %v415 = vtanh.pop %v414
    %v416 = vmul.f32 %v409, %v415
    %v417 = vpack.c.bf16 %v416, %v416
    %418 = vmatpush.bf16.msra.mxu0 %v313
    %419 = vmatpush.bf16.msra.mxu0 %v312
    %420 = vmatpush.bf16.msra.mxu0 %v311
    %421 = vmatpush.bf16.msra.mxu0 %v310
    %422 = vmatpush.bf16.msra.mxu0 %v309
    %423 = vmatpush.bf16.msra.mxu0 %v308
    %424 = vmatpush.bf16.msra.mxu0 %v307
    %425 = vmatpush.bf16.msra.mxu0 %v306
    %426 = vmatmul.bf16.gmra.mxu0 %v417
    %v427 = vpop.f32.mrf.mxu0
    %v428 = vadd.f32 0.0, %v427
    %v429 = vpop.f32.mrf.mxu0
    %430 = vdwg.mxu0
    %v431 = vadd.f32 %v247, %v428
    %v432 = vmul.f32 %v431, 0.5
    %v433 = vsel %vm110, %v431, %v432
    %v434 = vtanh.pop %v433
    %v435 = vmul.f32 %v434, 0.5
    %v436 = vadd.f32 %v435, 0.5
    %v437 = vsel %vm110, %v434, %v436
    %438 = vrot.lane.b32.xlu0 %v437, 32
    %v439 = vpop.permute.xlu0 %438
    %440 = vrot.lane.b32.xlu0 %v437, 64
    %v441 = vpop.permute.xlu0 %440
    %442 = vrot.lane.b32.xlu0 %v437, 96
    %v443 = vpop.permute.xlu0 %442
    %v444 = vmul.f32 %v437, %v414
    %v445 = vmul.f32 %v439, %v443
    %v446 = vadd.f32 %v444, %v445
    %v447 = vtanh.pop %v446
    %v448 = vmul.f32 %v441, %v447
    %v449 = vpack.c.bf16 %v448, %v448
    %450 = vmatpush.bf16.msra.mxu0 %v313
    %451 = vmatpush.bf16.msra.mxu0 %v312
    %452 = vmatpush.bf16.msra.mxu0 %v311
    %453 = vmatpush.bf16.msra.mxu0 %v310
    %454 = vmatpush.bf16.msra.mxu0 %v309
    %455 = vmatpush.bf16.msra.mxu0 %v308
    %456 = vmatpush.bf16.msra.mxu0 %v307
    %457 = vmatpush.bf16.msra.mxu0 %v306
    %458 = vmatmul.bf16.gmra.mxu0 %v449
    %v459 = vpop.f32.mrf.mxu0
    %v460 = vadd.f32 0.0, %v459
    %v461 = vpop.f32.mrf.mxu0
    %462 = vdwg.mxu0
    %v463 = vadd.f32 %v249, %v460
    %v464 = vmul.f32 %v463, 0.5
    %v465 = vsel %vm110, %v463, %v464
    %v466 = vtanh.pop %v465
    %v467 = vmul.f32 %v466, 0.5
    %v468 = vadd.f32 %v467, 0.5
    %v469 = vsel %vm110, %v466, %v468
    %470 = vrot.lane.b32.xlu0 %v469, 32
    %v471 = vpop.permute.xlu0 %470
    %472 = vrot.lane.b32.xlu0 %v469, 64
    %v473 = vpop.permute.xlu0 %472
    %474 = vrot.lane.b32.xlu0 %v469, 96
    %v475 = vpop.permute.xlu0 %474
    %v476 = vmul.f32 %v469, %v446
    %v477 = vmul.f32 %v471, %v475
    %v478 = vadd.f32 %v476, %v477
    %v479 = vtanh.pop %v478
    %v480 = vmul.f32 %v473, %v479
    %v481 = vpack.c.bf16 %v480, %v480
    %482 = vmatpush.bf16.msra.mxu0 %v313
    %483 = vmatpush.bf16.msra.mxu0 %v312
    %484 = vmatpush.bf16.msra.mxu0 %v311
    %485 = vmatpush.bf16.msra.mxu0 %v310
    %486 = vmatpush.bf16.msra.mxu0 %v309
    %487 = vmatpush.bf16.msra.mxu0 %v308
    %488 = vmatpush.bf16.msra.mxu0 %v307
    %489 = vmatpush.bf16.msra.mxu0 %v306
    %490 = vmatmul.bf16.gmra.mxu0 %v481
    %v491 = vpop.f32.mrf.mxu0
    %v492 = vadd.f32 0.0, %v491
    %v493 = vpop.f32.mrf.mxu0
    %494 = vdwg.mxu0
    %v495 = vadd.f32 %v252, %v492
    %v496 = vmul.f32 %v495, 0.5
    %v497 = vsel %vm110, %v495, %v496
    %v498 = vtanh.pop %v497
    %v499 = vmul.f32 %v498, 0.5
    %v500 = vadd.f32 %v499, 0.5
    %v501 = vsel %vm110, %v498, %v500
    %502 = vrot.lane.b32.xlu0 %v501, 32
    %v503 = vpop.permute.xlu0 %502
    %504 = vrot.lane.b32.xlu0 %v501, 64
    %v505 = vpop.permute.xlu0 %504
    %506 = vrot.lane.b32.xlu0 %v501, 96
    %v507 = vpop.permute.xlu0 %506
    %v508 = vmul.f32 %v501, %v478
    %v509 = vmul.f32 %v503, %v507
    %v510 = vadd.f32 %v508, %v509
    %v511 = vtanh.pop %v510
    %v512 = vmul.f32 %v505, %v511
    %v513 = vpack.c.bf16 %v512, %v512
    %514 = vmatpush.bf16.msra.mxu0 %v313
    %515 = vmatpush.bf16.msra.mxu0 %v312
    %516 = vmatpush.bf16.msra.mxu0 %v311
    %517 = vmatpush.bf16.msra.mxu0 %v310
    %518 = vmatpush.bf16.msra.mxu0 %v309
    %519 = vmatpush.bf16.msra.mxu0 %v308
    %520 = vmatpush.bf16.msra.mxu0 %v307
    %521 = vmatpush.bf16.msra.mxu0 %v306
    %522 = vmatmul.bf16.gmra.mxu0 %v513
    %v523 = vpop.f32.mrf.mxu0
    %v524 = vadd.f32 0.0, %v523
    %v525 = vpop.f32.mrf.mxu0
    %526 = vdwg.mxu0
    %v527 = vadd.f32 %v254, %v524
    %v528 = vmul.f32 %v527, 0.5
    %v529 = vsel %vm110, %v527, %v528
    %v530 = vtanh.pop %v529
    %v531 = vmul.f32 %v530, 0.5
    %v532 = vadd.f32 %v531, 0.5
    %v533 = vsel %vm110, %v530, %v532
    %534 = vrot.lane.b32.xlu0 %v533, 32
    %v535 = vpop.permute.xlu0 %534
    %536 = vrot.lane.b32.xlu0 %v533, 64
    %v537 = vpop.permute.xlu0 %536
    %538 = vrot.lane.b32.xlu0 %v533, 96
    %v539 = vpop.permute.xlu0 %538
    %v540 = vmul.f32 %v533, %v510
    %v541 = vmul.f32 %v535, %v539
    %v542 = vadd.f32 %v540, %v541
    %v543 = vtanh.pop %v542
    %v544 = vmul.f32 %v537, %v543
    %v545 = vpack.c.bf16 %v352, %v272
    %v546 = vpack.c.bf16 %v416, %v384
    %v547 = vpack.c.bf16 %v480, %v448
    %v548 = vpack.c.bf16 %v544, %v512
    %s549 = scalar_lea.vmem [#allocation5], 64
    %v550 = vld [vmem:[%s549] sm:$0xf]
    %v551 = vld [vmem:[%s549 + $0x4] sm:$0xf]
    %v552 = vld [vmem:[%s549 + $0x8] sm:$0xf]
    %v553 = vld [vmem:[%s549 + $0xc] sm:$0xf]
    %v554 = vld [vmem:[%s549 + $0x10] sm:$0xf]
    %v555 = vld [vmem:[%s549 + $0x14] sm:$0xf]
    %v556 = vld [vmem:[%s549 + $0x18] sm:$0xf]
    %v557 = vld [vmem:[%s549 + $0x1c] sm:$0xf]
    %v558 = vld [vmem:[%s549 + $0x20] sm:$0xf]
    %v559 = vld [vmem:[%s549 + $0x24] sm:$0xf]
    %v560 = vld [vmem:[%s549 + $0x28] sm:$0xf]
    %v561 = vld [vmem:[%s549 + $0x2c] sm:$0xf]
    %v562 = vld [vmem:[%s549 + $0x30] sm:$0xf]
    %v563 = vld [vmem:[%s549 + $0x34] sm:$0xf]
    %v564 = vld [vmem:[%s549 + $0x38] sm:$0xf]
    %v565 = vld [vmem:[%s549 + $0x3c] sm:$0xf]
    %s566 = scalar_lea.vmem [#allocation7], 64
    %v567 = vld [vmem:[%s566] sm:$0xf]
    %v568 = vld [vmem:[%s566 + $0x4] sm:$0xf]
    %v569 = vld [vmem:[%s566 + $0x8] sm:$0xf]
    %v570 = vld [vmem:[%s566 + $0xc] sm:$0xf]
    %v571 = vld [vmem:[%s566 + $0x10] sm:$0xf]
    %v572 = vld [vmem:[%s566 + $0x14] sm:$0xf]
    %v573 = vld [vmem:[%s566 + $0x18] sm:$0xf]
    %v574 = vld [vmem:[%s566 + $0x1c] sm:$0xf]
    %v575 = vld [vmem:[%s566 + $0x20] sm:$0xf]
    %v576 = vld [vmem:[%s566 + $0x24] sm:$0xf]
    %v577 = vld [vmem:[%s566 + $0x28] sm:$0xf]
    %v578 = vld [vmem:[%s566 + $0x2c] sm:$0xf]
    %v579 = vld [vmem:[%s566 + $0x30] sm:$0xf]
    %v580 = vld [vmem:[%s566 + $0x34] sm:$0xf]
    %v581 = vld [vmem:[%s566 + $0x38] sm:$0xf]
    %v582 = vld [vmem:[%s566 + $0x3c] sm:$0xf]
    %s583 = scalar_lea.vmem %s3, 1
    %v584 = vld [vmem:[%s583] sm:$0x1]
    %v586 = vperm.slane %v584, 0
    %v604 = vunpack.c.l.b16 %v550
    %v605 = vunpack.c.l.b16 %v551
    %v606 = vunpack.c.l.b16 %v552
    %v607 = vunpack.c.l.b16 %v553
    %v608 = vunpack.c.l.b16 %v554
    %v609 = vunpack.c.l.b16 %v555
    %v610 = vunpack.c.l.b16 %v556
    %v611 = vunpack.c.l.b16 %v557
    %v612 = vunpack.c.l.b16 %v558
    %v613 = vunpack.c.l.b16 %v559
    %v614 = vunpack.c.l.b16 %v560
    %v615 = vunpack.c.l.b16 %v561
    %v616 = vunpack.c.l.b16 %v562
    %v617 = vunpack.c.l.b16 %v563
    %v618 = vunpack.c.l.b16 %v564
    %v619 = vunpack.c.l.b16 %v565
    %v620 = vpack.c.b16 %v605, %v604
    %v621 = vpack.c.b16 %v607, %v606
    %v622 = vpack.c.b16 %v609, %v608
    %v623 = vpack.c.b16 %v611, %v610
    %v624 = vpack.c.b16 %v613, %v612
    %v625 = vpack.c.b16 %v615, %v614
    %v626 = vpack.c.b16 %v617, %v616
    %v627 = vpack.c.b16 %v619, %v618
    %636 = vmatpush.bf16.msra.mxu0 %v627
    %637 = vmatpush.bf16.msra.mxu0 %v626
    %638 = vmatpush.bf16.msra.mxu0 %v625
    %639 = vmatpush.bf16.msra.mxu0 %v624
    %640 = vmatpush.bf16.msra.mxu0 %v623
    %641 = vmatpush.bf16.msra.mxu0 %v622
    %642 = vmatpush.bf16.msra.mxu0 %v621
    %643 = vmatpush.bf16.msra.mxu0 %v620
    %644 = vmatmul.bf16.gmra.mxu0 %v545
    %v645 = vpop.f32.mrf.mxu0
    %v646 = vadd.f32 %v586, %v645
    %v647 = vpop.f32.mrf.mxu0
    %v648 = vadd.f32 %v586, %v647
    %649 = vmatmul.bf16.gmra.mxu0 %v546
    %v650 = vpop.f32.mrf.mxu0
    %v651 = vadd.f32 %v586, %v650
    %v652 = vpop.f32.mrf.mxu0
    %v653 = vadd.f32 %v586, %v652
    %654 = vmatmul.bf16.gmra.mxu0 %v547
    %v655 = vpop.f32.mrf.mxu0
    %v656 = vadd.f32 %v586, %v655
    %v657 = vpop.f32.mrf.mxu0
    %v658 = vadd.f32 %v586, %v657
    %659 = vmatmul.bf16.gmra.mxu0 %v548
    %v660 = vpop.f32.mrf.mxu0
    %v661 = vadd.f32 %v586, %v660
    %v662 = vpop.f32.mrf.mxu0
    %v663 = vadd.f32 %v586, %v662
    %664 = vdwg.mxu0
    %v665 = vmul.f32 %v646, 0.5
    %v666 = vsel %vm110, %v646, %v665
    %v667 = vtanh.pop %v666
    %v668 = vmul.f32 %v667, 0.5
    %v669 = vadd.f32 %v668, 0.5
    %v670 = vsel %vm110, %v667, %v669
    %671 = vrot.lane.b32.xlu0 %v670, 32
    %v672 = vpop.permute.xlu0 %671
    %673 = vrot.lane.b32.xlu0 %v670, 64
    %v674 = vpop.permute.xlu0 %673
    %675 = vrot.lane.b32.xlu0 %v670, 96
    %v676 = vpop.permute.xlu0 %675
    %v677 = vmul.f32 %v670, 0.0
    %v678 = vmul.f32 %v672, %v676
    %v679 = vadd.f32 %v677, %v678
    %v680 = vtanh.pop %v679
    %v681 = vmul.f32 %v674, %v680
    %v682 = vpack.c.bf16 %v681, %v681
    %v699 = vunpack.c.l.b16 %v567
    %v700 = vunpack.c.l.b16 %v568
    %v701 = vunpack.c.l.b16 %v569
    %v702 = vunpack.c.l.b16 %v570
    %v703 = vunpack.c.l.b16 %v571
    %v704 = vunpack.c.l.b16 %v572
    %v705 = vunpack.c.l.b16 %v573
    %v706 = vunpack.c.l.b16 %v574
    %v707 = vunpack.c.l.b16 %v575
    %v708 = vunpack.c.l.b16 %v576
    %v709 = vunpack.c.l.b16 %v577
    %v710 = vunpack.c.l.b16 %v578
    %v711 = vunpack.c.l.b16 %v579
    %v712 = vunpack.c.l.b16 %v580
    %v713 = vunpack.c.l.b16 %v581
    %v714 = vunpack.c.l.b16 %v582
    %v715 = vpack.c.b16 %v700, %v699
    %v716 = vpack.c.b16 %v702, %v701
    %v717 = vpack.c.b16 %v704, %v703
    %v718 = vpack.c.b16 %v706, %v705
    %v719 = vpack.c.b16 %v708, %v707
    %v720 = vpack.c.b16 %v710, %v709
    %v721 = vpack.c.b16 %v712, %v711
    %v722 = vpack.c.b16 %v714, %v713
    %731 = vmatpush.bf16.msra.mxu0 %v722
    %732 = vmatpush.bf16.msra.mxu0 %v721
    %733 = vmatpush.bf16.msra.mxu0 %v720
    %734 = vmatpush.bf16.msra.mxu0 %v719
    %735 = vmatpush.bf16.msra.mxu0 %v718
    %736 = vmatpush.bf16.msra.mxu0 %v717
    %737 = vmatpush.bf16.msra.mxu0 %v716
    %738 = vmatpush.bf16.msra.mxu0 %v715
    %739 = vmatmul.bf16.gmra.mxu0 %v682
    %v740 = vpop.f32.mrf.mxu0
    %v741 = vadd.f32 0.0, %v740
    %v742 = vpop.f32.mrf.mxu0
    %743 = vdwg.mxu0
    %v744 = vadd.f32 %v648, %v741
    %v745 = vmul.f32 %v744, 0.5
    %v746 = vsel %vm110, %v744, %v745
    %v747 = vtanh.pop %v746
    %v748 = vmul.f32 %v747, 0.5
    %v749 = vadd.f32 %v748, 0.5
    %v750 = vsel %vm110, %v747, %v749
    %751 = vrot.lane.b32.xlu0 %v750, 32
    %v752 = vpop.permute.xlu0 %751
    %753 = vrot.lane.b32.xlu0 %v750, 64
    %v754 = vpop.permute.xlu0 %753
    %755 = vrot.lane.b32.xlu0 %v750, 96
    %v756 = vpop.permute.xlu0 %755
    %v757 = vmul.f32 %v750, %v679
    %v758 = vmul.f32 %v752, %v756
    %v759 = vadd.f32 %v757, %v758
    %v760 = vtanh.pop %v759
    %v761 = vmul.f32 %v754, %v760
    %v762 = vpack.c.bf16 %v761, %v761
    %763 = vmatpush.bf16.msra.mxu0 %v722
    %764 = vmatpush.bf16.msra.mxu0 %v721
    %765 = vmatpush.bf16.msra.mxu0 %v720
    %766 = vmatpush.bf16.msra.mxu0 %v719
    %767 = vmatpush.bf16.msra.mxu0 %v718
    %768 = vmatpush.bf16.msra.mxu0 %v717
    %769 = vmatpush.bf16.msra.mxu0 %v716
    %770 = vmatpush.bf16.msra.mxu0 %v715
    %771 = vmatmul.bf16.gmra.mxu0 %v762
    %v772 = vpop.f32.mrf.mxu0
    %v773 = vadd.f32 0.0, %v772
    %v774 = vpop.f32.mrf.mxu0
    %775 = vdwg.mxu0
    %v776 = vadd.f32 %v651, %v773
    %v777 = vmul.f32 %v776, 0.5
    %v778 = vsel %vm110, %v776, %v777
    %v779 = vtanh.pop %v778
    %v780 = vmul.f32 %v779, 0.5
    %v781 = vadd.f32 %v780, 0.5
    %v782 = vsel %vm110, %v779, %v781
    %783 = vrot.lane.b32.xlu0 %v782, 32
    %v784 = vpop.permute.xlu0 %783
    %785 = vrot.lane.b32.xlu0 %v782, 64
    %v786 = vpop.permute.xlu0 %785
    %787 = vrot.lane.b32.xlu0 %v782, 96
    %v788 = vpop.permute.xlu0 %787
    %v789 = vmul.f32 %v782, %v759
    %v790 = vmul.f32 %v784, %v788
    %v791 = vadd.f32 %v789, %v790
    %v792 = vtanh.pop %v791
    %v793 = vmul.f32 %v786, %v792
    %v794 = vpack.c.bf16 %v793, %v793
    %795 = vmatpush.bf16.msra.mxu0 %v722
    %796 = vmatpush.bf16.msra.mxu0 %v721
    %797 = vmatpush.bf16.msra.mxu0 %v720
    %798 = vmatpush.bf16.msra.mxu0 %v719
    %799 = vmatpush.bf16.msra.mxu0 %v718
    %800 = vmatpush.bf16.msra.mxu0 %v717
    %801 = vmatpush.bf16.msra.mxu0 %v716
    %802 = vmatpush.bf16.msra.mxu0 %v715
    %803 = vmatmul.bf16.gmra.mxu0 %v794
    %v804 = vpop.f32.mrf.mxu0
    %v805 = vadd.f32 0.0, %v804
    %v806 = vpop.f32.mrf.mxu0
    %807 = vdwg.mxu0
    %v808 = vadd.f32 %v653, %v805
    %v809 = vmul.f32 %v808, 0.5
    %v810 = vsel %vm110, %v808, %v809
    %v811 = vtanh.pop %v810
    %v812 = vmul.f32 %v811, 0.5
    %v813 = vadd.f32 %v812, 0.5
    %v814 = vsel %vm110, %v811, %v813
    %815 = vrot.lane.b32.xlu0 %v814, 32
    %v816 = vpop.permute.xlu0 %815
    %817 = vrot.lane.b32.xlu0 %v814, 64
    %v818 = vpop.permute.xlu0 %817
    %819 = vrot.lane.b32.xlu0 %v814, 96
    %v820 = vpop.permute.xlu0 %819
    %v821 = vmul.f32 %v814, %v791
    %v822 = vmul.f32 %v816, %v820
    %v823 = vadd.f32 %v821, %v822
    %v824 = vtanh.pop %v823
    %v825 = vmul.f32 %v818, %v824
    %v826 = vpack.c.bf16 %v825, %v825
    %827 = vmatpush.bf16.msra.mxu0 %v722
    %828 = vmatpush.bf16.msra.mxu0 %v721
    %829 = vmatpush.bf16.msra.mxu0 %v720
    %830 = vmatpush.bf16.msra.mxu0 %v719
    %831 = vmatpush.bf16.msra.mxu0 %v718
    %832 = vmatpush.bf16.msra.mxu0 %v717
    %833 = vmatpush.bf16.msra.mxu0 %v716
    %834 = vmatpush.bf16.msra.mxu0 %v715
    %835 = vmatmul.bf16.gmra.mxu0 %v826
    %v836 = vpop.f32.mrf.mxu0
    %v837 = vadd.f32 0.0, %v836
    %v838 = vpop.f32.mrf.mxu0
    %839 = vdwg.mxu0
    %v840 = vadd.f32 %v656, %v837
    %v841 = vmul.f32 %v840, 0.5
    %v842 = vsel %vm110, %v840, %v841
    %v843 = vtanh.pop %v842
    %v844 = vmul.f32 %v843, 0.5
    %v845 = vadd.f32 %v844, 0.5
    %v846 = vsel %vm110, %v843, %v845
    %847 = vrot.lane.b32.xlu0 %v846, 32
    %v848 = vpop.permute.xlu0 %847
    %849 = vrot.lane.b32.xlu0 %v846, 64
    %v850 = vpop.permute.xlu0 %849
    %851 = vrot.lane.b32.xlu0 %v846, 96
    %v852 = vpop.permute.xlu0 %851
    %v853 = vmul.f32 %v846, %v823
    %v854 = vmul.f32 %v848, %v852
    %v855 = vadd.f32 %v853, %v854
    %v856 = vtanh.pop %v855
    %v857 = vmul.f32 %v850, %v856
    %v858 = vpack.c.bf16 %v857, %v857
    %859 = vmatpush.bf16.msra.mxu0 %v722
    %860 = vmatpush.bf16.msra.mxu0 %v721
    %861 = vmatpush.bf16.msra.mxu0 %v720
    %862 = vmatpush.bf16.msra.mxu0 %v719
    %863 = vmatpush.bf16.msra.mxu0 %v718
    %864 = vmatpush.bf16.msra.mxu0 %v717
    %865 = vmatpush.bf16.msra.mxu0 %v716
    %866 = vmatpush.bf16.msra.mxu0 %v715
    %867 = vmatmul.bf16.gmra.mxu0 %v858
    %v868 = vpop.f32.mrf.mxu0
    %v869 = vadd.f32 0.0, %v868
    %v870 = vpop.f32.mrf.mxu0
    %871 = vdwg.mxu0
    %v872 = vadd.f32 %v658, %v869
    %v873 = vmul.f32 %v872, 0.5
    %v874 = vsel %vm110, %v872, %v873
    %v875 = vtanh.pop %v874
    %v876 = vmul.f32 %v875, 0.5
    %v877 = vadd.f32 %v876, 0.5
    %v878 = vsel %vm110, %v875, %v877
    %879 = vrot.lane.b32.xlu0 %v878, 32
    %v880 = vpop.permute.xlu0 %879
    %881 = vrot.lane.b32.xlu0 %v878, 64
    %v882 = vpop.permute.xlu0 %881
    %883 = vrot.lane.b32.xlu0 %v878, 96
    %v884 = vpop.permute.xlu0 %883
    %v885 = vmul.f32 %v878, %v855
    %v886 = vmul.f32 %v880, %v884
    %v887 = vadd.f32 %v885, %v886
    %v888 = vtanh.pop %v887
    %v889 = vmul.f32 %v882, %v888
    %v890 = vpack.c.bf16 %v889, %v889
    %891 = vmatpush.bf16.msra.mxu0 %v722
    %892 = vmatpush.bf16.msra.mxu0 %v721
    %893 = vmatpush.bf16.msra.mxu0 %v720
    %894 = vmatpush.bf16.msra.mxu0 %v719
    %895 = vmatpush.bf16.msra.mxu0 %v718
    %896 = vmatpush.bf16.msra.mxu0 %v717
    %897 = vmatpush.bf16.msra.mxu0 %v716
    %898 = vmatpush.bf16.msra.mxu0 %v715
    %899 = vmatmul.bf16.gmra.mxu0 %v890
    %v900 = vpop.f32.mrf.mxu0
    %v901 = vadd.f32 0.0, %v900
    %v902 = vpop.f32.mrf.mxu0
    %903 = vdwg.mxu0
    %v904 = vadd.f32 %v661, %v901
    %v905 = vmul.f32 %v904, 0.5
    %v906 = vsel %vm110, %v904, %v905
    %v907 = vtanh.pop %v906
    %v908 = vmul.f32 %v907, 0.5
    %v909 = vadd.f32 %v908, 0.5
    %v910 = vsel %vm110, %v907, %v909
    %911 = vrot.lane.b32.xlu0 %v910, 32
    %v912 = vpop.permute.xlu0 %911
    %913 = vrot.lane.b32.xlu0 %v910, 64
    %v914 = vpop.permute.xlu0 %913
    %915 = vrot.lane.b32.xlu0 %v910, 96
    %v916 = vpop.permute.xlu0 %915
    %v917 = vmul.f32 %v910, %v887
    %v918 = vmul.f32 %v912, %v916
    %v919 = vadd.f32 %v917, %v918
    %v920 = vtanh.pop %v919
    %v921 = vmul.f32 %v914, %v920
    %v922 = vpack.c.bf16 %v921, %v921
    %923 = vmatpush.bf16.msra.mxu0 %v722
    %924 = vmatpush.bf16.msra.mxu0 %v721
    %925 = vmatpush.bf16.msra.mxu0 %v720
    %926 = vmatpush.bf16.msra.mxu0 %v719
    %927 = vmatpush.bf16.msra.mxu0 %v718
    %928 = vmatpush.bf16.msra.mxu0 %v717
    %929 = vmatpush.bf16.msra.mxu0 %v716
    %930 = vmatpush.bf16.msra.mxu0 %v715
    %931 = vmatmul.bf16.gmra.mxu0 %v922
    %v932 = vpop.f32.mrf.mxu0
    %v933 = vadd.f32 0.0, %v932
    %v934 = vpop.f32.mrf.mxu0
    %935 = vdwg.mxu0
    %v936 = vadd.f32 %v663, %v933
    %v937 = vmul.f32 %v936, 0.5
    %v938 = vsel %vm110, %v936, %v937
    %v939 = vtanh.pop %v938
    %v940 = vmul.f32 %v939, 0.5
    %v941 = vadd.f32 %v940, 0.5
    %v942 = vsel %vm110, %v939, %v941
    %943 = vrot.lane.b32.xlu0 %v942, 32
    %v944 = vpop.permute.xlu0 %943
    %945 = vrot.lane.b32.xlu0 %v942, 64
    %v946 = vpop.permute.xlu0 %945
    %947 = vrot.lane.b32.xlu0 %v942, 96
    %v948 = vpop.permute.xlu0 %947
    %v949 = vmul.f32 %v942, %v919
    %v950 = vmul.f32 %v944, %v948
    %v951 = vadd.f32 %v949, %v950
    %v952 = vtanh.pop %v951
    %v953 = vmul.f32 %v946, %v952
    %v954 = vpack.c.bf16 %v953, %v953
    %v955 = vld [vmem:[#allocation8] sm:$0xf]
    %v956 = vld [vmem:[#allocation8 + $0x4] sm:$0xf]
    %v957 = vld [vmem:[#allocation8 + $0x8] sm:$0xf]
    %v958 = vld [vmem:[#allocation8 + $0xc] sm:$0xf]
    %v959 = vld [vmem:[#allocation8 + $0x10] sm:$0xf]
    %v960 = vld [vmem:[#allocation8 + $0x14] sm:$0xf]
    %v961 = vld [vmem:[#allocation8 + $0x18] sm:$0xf]
    %v962 = vld [vmem:[#allocation8 + $0x1c] sm:$0xf]
    %v963 = vld [vmem:[#allocation8 + $0x20] sm:$0xf]
    %v964 = vld [vmem:[#allocation8 + $0x24] sm:$0xf]
    %v965 = vld [vmem:[#allocation8 + $0x28] sm:$0xf]
    %v966 = vld [vmem:[#allocation8 + $0x2c] sm:$0xf]
    %v967 = vld [vmem:[#allocation8 + $0x30] sm:$0xf]
    %v968 = vld [vmem:[#allocation8 + $0x34] sm:$0xf]
    %v969 = vld [vmem:[#allocation8 + $0x38] sm:$0xf]
    %v970 = vld [vmem:[#allocation8 + $0x3c] sm:$0xf]
    %v971 = vld [vmem:[%s5] sm:$0x1]
    %v973 = vperm.slane %v971, 0
    %v991 = vunpack.c.l.b16 %v955
    %v992 = vunpack.c.l.b16 %v956
    %v993 = vunpack.c.l.b16 %v957
    %v994 = vunpack.c.l.b16 %v958
    %v995 = vunpack.c.l.b16 %v959
    %v996 = vunpack.c.l.b16 %v960
    %v997 = vunpack.c.l.b16 %v961
    %v998 = vunpack.c.l.b16 %v962
    %v999 = vunpack.c.l.b16 %v963
    %v1000 = vunpack.c.l.b16 %v964
    %v1001 = vunpack.c.l.b16 %v965
    %v1002 = vunpack.c.l.b16 %v966
    %v1003 = vunpack.c.l.b16 %v967
    %v1004 = vunpack.c.l.b16 %v968
    %v1005 = vunpack.c.l.b16 %v969
    %v1006 = vunpack.c.l.b16 %v970
    %v1007 = vpack.c.b16 %v992, %v991
    %v1008 = vpack.c.b16 %v994, %v993
    %v1009 = vpack.c.b16 %v996, %v995
    %v1010 = vpack.c.b16 %v998, %v997
    %v1011 = vpack.c.b16 %v1000, %v999
    %v1012 = vpack.c.b16 %v1002, %v1001
    %v1013 = vpack.c.b16 %v1004, %v1003
    %v1014 = vpack.c.b16 %v1006, %v1005
    %1023 = vmatpush.bf16.msra.mxu0 %v1014
    %1024 = vmatpush.bf16.msra.mxu0 %v1013
    %1025 = vmatpush.bf16.msra.mxu0 %v1012
    %1026 = vmatpush.bf16.msra.mxu0 %v1011
    %1027 = vmatpush.bf16.msra.mxu0 %v1010
    %1028 = vmatpush.bf16.msra.mxu0 %v1009
    %1029 = vmatpush.bf16.msra.mxu0 %v1008
    %1030 = vmatpush.bf16.msra.mxu0 %v1007
    %1031 = vmatmul.bf16.gmra.mxu0 %v954
    %v1032 = vpop.f32.mrf.mxu0
    %v1033 = vadd.f32 %v973, %v1032
    %v1034 = vpop.f32.mrf.mxu0
    %1035 = vdwg.mxu0
    %v1036 = vmax.f32 %v1033, 0.0
    %v1037 = vpack.c.bf16 %v1036, %v1036
    %v1038 = vld [vmem:[#allocation10] sm:$0xf]
    %v1039 = vld [vmem:[#allocation10 + $0x4] sm:$0xf]
    %v1040 = vld [vmem:[#allocation10 + $0x8] sm:$0xf]
    %v1041 = vld [vmem:[#allocation10 + $0xc] sm:$0xf]
    %v1042 = vld [vmem:[#allocation10 + $0x10] sm:$0xf]
    %v1043 = vld [vmem:[#allocation10 + $0x14] sm:$0xf]
    %v1044 = vld [vmem:[#allocation10 + $0x18] sm:$0xf]
    %v1045 = vld [vmem:[#allocation10 + $0x1c] sm:$0xf]
    %v1046 = vld [vmem:[#allocation10 + $0x20] sm:$0xf]
    %v1047 = vld [vmem:[#allocation10 + $0x24] sm:$0xf]
    %v1048 = vld [vmem:[#allocation10 + $0x28] sm:$0xf]
    %v1049 = vld [vmem:[#allocation10 + $0x2c] sm:$0xf]
    %v1050 = vld [vmem:[#allocation10 + $0x30] sm:$0xf]
    %v1051 = vld [vmem:[#allocation10 + $0x34] sm:$0xf]
    %v1052 = vld [vmem:[#allocation10 + $0x38] sm:$0xf]
    %v1053 = vld [vmem:[#allocation10 + $0x3c] sm:$0xf]
    %v1054 = vld [vmem:[%s7] sm:$0x1]
    %v1056 = vperm.slane %v1054, 0
    %v1074 = vunpack.c.l.b16 %v1038
    %v1075 = vunpack.c.l.b16 %v1039
    %v1076 = vunpack.c.l.b16 %v1040
    %v1077 = vunpack.c.l.b16 %v1041
    %v1078 = vunpack.c.l.b16 %v1042
    %v1079 = vunpack.c.l.b16 %v1043
    %v1080 = vunpack.c.l.b16 %v1044
    %v1081 = vunpack.c.l.b16 %v1045
    %v1082 = vunpack.c.l.b16 %v1046
    %v1083 = vunpack.c.l.b16 %v1047
    %v1084 = vunpack.c.l.b16 %v1048
    %v1085 = vunpack.c.l.b16 %v1049
    %v1086 = vunpack.c.l.b16 %v1050
    %v1087 = vunpack.c.l.b16 %v1051
    %v1088 = vunpack.c.l.b16 %v1052
    %v1089 = vunpack.c.l.b16 %v1053
    %v1090 = vpack.c.b16 %v1075, %v1074
    %v1091 = vpack.c.b16 %v1077, %v1076
    %v1092 = vpack.c.b16 %v1079, %v1078
    %v1093 = vpack.c.b16 %v1081, %v1080
    %v1094 = vpack.c.b16 %v1083, %v1082
    %v1095 = vpack.c.b16 %v1085, %v1084
    %v1096 = vpack.c.b16 %v1087, %v1086
    %v1097 = vpack.c.b16 %v1089, %v1088
    %1106 = vmatpush.bf16.msra.mxu0 %v1097
    %1107 = vmatpush.bf16.msra.mxu0 %v1096
    %1108 = vmatpush.bf16.msra.mxu0 %v1095
    %1109 = vmatpush.bf16.msra.mxu0 %v1094
    %1110 = vmatpush.bf16.msra.mxu0 %v1093
    %1111 = vmatpush.bf16.msra.mxu0 %v1092
    %1112 = vmatpush.bf16.msra.mxu0 %v1091
    %1113 = vmatpush.bf16.msra.mxu0 %v1090
    %1114 = vmatmul.bf16.gmra.mxu0 %v1037
    %v1115 = vpop.f32.mrf.mxu0
    %v1116 = vadd.f32 %v1056, %v1115
    %v1117 = vpop.f32.mrf.mxu0
    %1118 = vdwg.mxu0
    %v1119 = vmax.f32 %v1116, 0.0
    %1120 = vst [vmem:[#allocation11] sm:$0xff] %v1119
    // Predicated region
    $region54: #{tpu_custom_call.1} parent=1 // pred_check
      _
    $region55: #{tpu_custom_call.1} parent=1 // pred_check_branch
      %1122 = sbr.rel (0) target = $region57
    $region56: #{tpu_custom_call.1} parent=1 // pred_region
      %1124 = vsyncadd [#allocation4], 0
      %s1126 = sshll.u32 [#allocation11], 4
      %s1127 = int_to_ptr.vmem [resolvable:$true] %s1126
      %s1128 = sshll.u32 %s8, 4
      %s1129 = int_to_ptr.hbm [resolvable:$true] %s1128
      %1131 = dma.vmem_to_hbm [thread:$0]  %s1127, 128, %s1129, [#allocation4]
    $region57: #{tpu_custom_call.1} parent=1 // pred_fallthru
      _
    // Predicated region
    $region58: #{tpu_custom_call.1} parent=1 // pred_check
      _
    $region59: #{tpu_custom_call.1} parent=1 // pred_check_branch
      %1133 = sbr.rel (0) target = $region61
    $region60: #{tpu_custom_call.1} parent=1 // pred_region
      %1135 = dma.done [#allocation4], 128
    $region61: #{tpu_custom_call.1} parent=1 // pred_fallthru
      _
    %1136 = vsyncpa [#allocation3], 1
    %1137 = vsyncpa [#allocation6], 1
    %1138 = vsyncpa [#allocation9], 1
    %1139 = vsyncpa [#allocation4], 1

</llo_original>
